<compile_context>
chip_gen: v7x
topology: tpu7x:2x2x1
jax: 0.10.0
libtpu: 0.0.40
codegen_flags: <defaults>
</compile_context>

<pallas_src>
import numpy as np
import jax
import jax.numpy as jnp
from jax import lax
from jax.experimental import pallas as pl
from jax.experimental.pallas import tpu as pltpu

LANES = 128


def _hann_taps(filter_size=5):
    """1-D normalized Hann taps (the 3x3 PyTorch filter is their outer product)."""
    a = np.hanning(filter_size)[1:-1]          # filter_size=5 -> [0.5, 1.0, 0.5]
    a = a / a.sum()                            # -> [0.25, 0.5, 0.25] exactly
    return tuple(float(v) for v in a)


def _l2pool_kernel_factory(H, W, taps, use_roll):
    """Separable 3x3 depthwise stencil on (H, W, planes) tiles, planes on lanes."""
    w0, w1, w2 = taps

    def kernel(x_ref, o_ref, hpad_ref):
        # x_ref/o_ref: (H, W, P); hpad_ref: (H+2, W, P) f32 scratch (H-halo only).
        s = x_ref[...].astype(jnp.float32)
        s = s * s

        # ---- W-direction 3-tap pass (sublane axis) ----
        if use_roll:
            col = lax.broadcasted_iota(jnp.int32, s.shape, 1)
            left = jnp.where(col == 0, 0.0, pltpu.roll(s, shift=1, axis=1))
            right = jnp.where(col == W - 1, 0.0, pltpu.roll(s, shift=W - 1, axis=1))
        else:
            zcol = jnp.zeros((H, 1, s.shape[-1]), jnp.float32)
            left = jnp.concatenate([zcol, s[:, : W - 1, :]], axis=1)
            right = jnp.concatenate([s[:, 1:, :], zcol], axis=1)
        tmp = w1 * s + (w0 * left + w2 * right)

        # ---- H-direction 3-tap pass (leading axis; fully aligned scratch) ----
        zrow = jnp.zeros(hpad_ref.shape[1:], hpad_ref.dtype)
        hpad_ref[0, :, :] = zrow              # zero only the 2 halo rows, every step
        hpad_ref[H + 1, :, :] = zrow
        hpad_ref[1:H + 1, :, :] = tmp
        out = w1 * tmp + (w0 * hpad_ref[0:H, :, :] + w2 * hpad_ref[2:H + 2, :, :])

        o_ref[...] = jnp.sqrt(out + 1e-12).astype(o_ref.dtype)

    return kernel


def _device_budget():
    """(per-buffer byte budget, vmem_limit_bytes) chosen from the chip's VMEM size."""
    cap = 64 * 1024 * 1024
    try:
        info = pltpu.get_tpu_info()
        cap_attr = getattr(info, "vmem_capacity_bytes", None)
        if cap_attr:
            cap = int(cap_attr)
    except Exception:
        pass
    if cap >= 100 * 1024 * 1024:                   # v5e / v6e: 128 MiB physical VMEM
        return 6 * 1024 * 1024, 64 * 1024 * 1024
    return 2 * 1024 * 1024, 40 * 1024 * 1024       # v7x: 64 MiB physical, 2 TCs


def _choose_plane_block(ncp, h, w, budget):
    """Largest 128-multiple divisor of ncp that fits the budget, preferring >=4 steps."""
    bytes_per_plane = h * w * 4
    m = ncp // LANES
    target_steps = min(4, m)
    for d in range(m, 0, -1):
        if m % d:
            continue
        pblk = LANES * d
        if pblk * bytes_per_plane <= budget and (m // d) >= target_steps:
            return pblk
    return LANES


def l2pooling_planes_last(xt, filter_size=5):
    """Core kernel entry point.  xt: (H, W, P) with P = N*C planes on the lane axis."""
    assert filter_size == 5, "only the module's filter_size=5 is supported"
    H, W, P = xt.shape
    taps = _hann_taps(filter_size)

    pad_p = (-P) % LANES
    if pad_p:
        xt = jnp.pad(xt, ((0, 0), (0, 0), (0, pad_p)))
    Pp = P + pad_p

    budget, vmem_limit = _device_budget()
    Pblk = _choose_plane_block(Pp, H, W, budget)

    def run(use_roll):
        return pl.pallas_call(
            _l2pool_kernel_factory(H, W, taps, use_roll),
            out_shape=jax.ShapeDtypeStruct((H, W, Pp), xt.dtype),
            grid_spec=pltpu.PrefetchScalarGridSpec(
                num_scalar_prefetch=0,
                grid=(Pp // Pblk,),
                in_specs=[pl.BlockSpec((H, W, Pblk), lambda p: (0, 0, p))],
                out_specs=pl.BlockSpec((H, W, Pblk), lambda p: (0, 0, p)),
                scratch_shapes=[pltpu.VMEM((H + 2, W, Pblk), jnp.float32)],
            ),
            compiler_params=pltpu.CompilerParams(
                dimension_semantics=("parallel",),
                vmem_limit_bytes=vmem_limit,
            ),
        )(xt)

    try:
        out = run(use_roll=True)
    except Exception:
        # TODO(synk): fallback for toolchains without sublane-axis pltpu.roll lowering.
        out = run(use_roll=False)

    if pad_p:
        out = out[:, :, :P]
    return out


def l2pooling(x, filter_size=5):
    """x: (N, C, H, W). Matches PyTorch L2pooling.forward (stride=1, pad=1)."""
    N, C, H, W = x.shape
    # Layout plumbing only.  A channels-last pipeline should call
    # l2pooling_planes_last directly and skip both HBM transposes.
    xt = jnp.transpose(x.reshape(N * C, H, W), (1, 2, 0))     # (H, W, N*C)
    out = l2pooling_planes_last(xt, filter_size)
    return jnp.transpose(out, (2, 0, 1)).reshape(N, C, H, W)


def l2pooling_reference(x, filter_size=5):
    """Pure-JAX reference: depthwise conv on x**2, then sqrt(+eps)."""
    N, C, H, W = x.shape
    pad = (filter_size - 2) // 2
    a = np.hanning(filter_size)[1:-1]
    g = a[:, None] * a[None, :]
    g = jnp.asarray(g / g.sum(), dtype=x.dtype)
    K = g.shape[0]
    w = jnp.broadcast_to(g[None, None, :, :], (C, 1, K, K))    # (C,1,K,K) like PyTorch
    out = lax.conv_general_dilated(
        x * x, w,
        window_strides=(1, 1),
        padding=((pad, pad), (pad, pad)),
        dimension_numbers=("NCHW", "OIHW", "NCHW"),
        feature_group_count=C,
    )
    return jnp.sqrt(out + 1e-12)


if __name__ == "__main__":
    key = jax.random.PRNGKey(0)

    # Small shape consistent with the module's depthwise L2pooling usage.
    N, C, H, W = 2, 4, 16, 16
    x = jax.random.normal(key, (N, C, H, W), dtype=jnp.float32)
    y = jax.block_until_ready(l2pooling(x, filter_size=5))
    assert y.shape == (N, C, H, W)
    np.testing.assert_allclose(np.asarray(y),
                               np.asarray(l2pooling_reference(x, filter_size=5)),
                               rtol=1e-5, atol=1e-5)

    # Lane-dense case: N*C already a multiple of 128 -> no pad, multi-step grid.
    x2 = jax.random.normal(jax.random.PRNGKey(1), (1, 256, 16, 16), dtype=jnp.float32)
    y2 = jax.block_until_ready(l2pooling(x2, filter_size=5))
    np.testing.assert_allclose(np.asarray(y2),
                               np.asarray(l2pooling_reference(x2, filter_size=5)),
                               rtol=1e-5, atol=1e-5)

    print("KERNEL_OK")
</pallas_src>

<mosaic_0001>
module attributes {stable_mosaic.version = 11 : i64} {
  func.func @kernel(%arg0: i32, %arg1: memref<16x16x128xf32, #tpu.memory_space<vmem>>, %arg2: memref<16x16x128xf32, #tpu.memory_space<vmem>>, %arg3: memref<18x16x128xf32, #tpu.memory_space<vmem>>) attributes {dimension_semantics = [#tpu.dimension_semantics<parallel>], iteration_bounds = array<i64: 1>, scalar_prefetch = 0 : i64, scratch_operands = 1 : i64, tpu.core_type = #tpu.core_type<tc>, window_params = [{transform_indices = @transform_0, window_bounds = array<i64: 16, 16, 128>}, {transform_indices = @transform_1, window_bounds = array<i64: 16, 16, 128>}]} {
    %c0 = arith.constant 0 : index
    %c0_0 = arith.constant 0 : index
    %c0_1 = arith.constant 0 : index
    %0 = vector.load %arg1[%c0, %c0_0, %c0_1] : memref<16x16x128xf32, #tpu.memory_space<vmem>>, vector<16x16x128xf32>
    %1 = arith.mulf %0, %0 : vector<16x16x128xf32>
    %2 = tpu.iota {dimensions = array<i32: 1>} : vector<16x16x128xi32>
    %c0_i32 = arith.constant 0 : i32
    %3 = vector.broadcast %c0_i32 : i32 to vector<16x16x128xi32>
    %4 = arith.cmpi eq, %2, %3 : vector<16x16x128xi32>
    %c1_i32 = arith.constant 1 : i32
    %5 = tpu.dynamic_rotate %1 by %c1_i32 dim 1 : vector<16x16x128xf32>, i32 -> vector<16x16x128xf32>
    %cst = arith.constant 0.000000e+00 : f32
    %6 = vector.broadcast %cst : f32 to vector<16x16x128xf32>
    %7 = arith.select %4, %6, %5 : vector<16x16x128xi1>, vector<16x16x128xf32>
    %c15_i32 = arith.constant 15 : i32
    %8 = vector.broadcast %c15_i32 : i32 to vector<16x16x128xi32>
    %9 = arith.cmpi eq, %2, %8 : vector<16x16x128xi32>
    %c15_i32_2 = arith.constant 15 : i32
    %10 = tpu.dynamic_rotate %1 by %c15_i32_2 dim 1 : vector<16x16x128xf32>, i32 -> vector<16x16x128xf32>
    %cst_3 = arith.constant 0.000000e+00 : f32
    %11 = vector.broadcast %cst_3 : f32 to vector<16x16x128xf32>
    %12 = arith.select %9, %11, %10 : vector<16x16x128xi1>, vector<16x16x128xf32>
    %cst_4 = arith.constant 5.000000e-01 : f32
    %13 = vector.broadcast %cst_4 : f32 to vector<16x16x128xf32>
    %14 = arith.mulf %13, %1 : vector<16x16x128xf32>
    %cst_5 = arith.constant 2.500000e-01 : f32
    %15 = vector.broadcast %cst_5 : f32 to vector<16x16x128xf32>
    %16 = arith.mulf %15, %7 : vector<16x16x128xf32>
    %cst_6 = arith.constant 2.500000e-01 : f32
    %17 = vector.broadcast %cst_6 : f32 to vector<16x16x128xf32>
    %18 = arith.mulf %17, %12 : vector<16x16x128xf32>
    %19 = arith.addf %16, %18 : vector<16x16x128xf32>
    %20 = arith.addf %14, %19 : vector<16x16x128xf32>
    %cst_7 = arith.constant 0.000000e+00 : f32
    %21 = vector.broadcast %cst_7 : f32 to vector<16x128xf32>
    %c0_8 = arith.constant 0 : index
    %c0_9 = arith.constant 0 : index
    %c0_10 = arith.constant 0 : index
    %22 = vector.load %arg3[%c0_8, %c0_9, %c0_10] : memref<18x16x128xf32, #tpu.memory_space<vmem>>, vector<1x16x128xf32>
    %23 = vector.shape_cast %22 : vector<1x16x128xf32> to vector<16x128xf32>
    %24 = vector.shape_cast %21 : vector<16x128xf32> to vector<1x16x128xf32>
    tpu.vector_store %arg3[%c0_8, %c0_9, %c0_10], %24 {strides = array<i32>} : memref<18x16x128xf32, #tpu.memory_space<vmem>>, vector<1x16x128xf32>,
    %c17 = arith.constant 17 : index
    %c0_11 = arith.constant 0 : index
    %c0_12 = arith.constant 0 : index
    %25 = vector.load %arg3[%c17, %c0_11, %c0_12] : memref<18x16x128xf32, #tpu.memory_space<vmem>>, vector<1x16x128xf32>
    %26 = vector.shape_cast %25 : vector<1x16x128xf32> to vector<16x128xf32>
    %27 = vector.shape_cast %21 : vector<16x128xf32> to vector<1x16x128xf32>
    tpu.vector_store %arg3[%c17, %c0_11, %c0_12], %27 {strides = array<i32>} : memref<18x16x128xf32, #tpu.memory_space<vmem>>, vector<1x16x128xf32>,
    %c1 = arith.constant 1 : index
    %c0_13 = arith.constant 0 : index
    %c0_14 = arith.constant 0 : index
    %28 = vector.load %arg3[%c1, %c0_13, %c0_14] : memref<18x16x128xf32, #tpu.memory_space<vmem>>, vector<16x16x128xf32>
    tpu.vector_store %arg3[%c1, %c0_13, %c0_14], %20 {strides = array<i32>} : memref<18x16x128xf32, #tpu.memory_space<vmem>>, vector<16x16x128xf32>,
    %cst_15 = arith.constant 5.000000e-01 : f32
    %29 = vector.broadcast %cst_15 : f32 to vector<16x16x128xf32>
    %30 = arith.mulf %29, %20 : vector<16x16x128xf32>
    %c0_16 = arith.constant 0 : index
    %c0_17 = arith.constant 0 : index
    %c0_18 = arith.constant 0 : index
    %31 = vector.load %arg3[%c0_16, %c0_17, %c0_18] : memref<18x16x128xf32, #tpu.memory_space<vmem>>, vector<16x16x128xf32>
    %cst_19 = arith.constant 2.500000e-01 : f32
    %32 = vector.broadcast %cst_19 : f32 to vector<16x16x128xf32>
    %33 = arith.mulf %32, %31 : vector<16x16x128xf32>
    %c2 = arith.constant 2 : index
    %c0_20 = arith.constant 0 : index
    %c0_21 = arith.constant 0 : index
    %34 = vector.load %arg3[%c2, %c0_20, %c0_21] : memref<18x16x128xf32, #tpu.memory_space<vmem>>, vector<16x16x128xf32>
    %cst_22 = arith.constant 2.500000e-01 : f32
    %35 = vector.broadcast %cst_22 : f32 to vector<16x16x128xf32>
    %36 = arith.mulf %35, %34 : vector<16x16x128xf32>
    %37 = arith.addf %33, %36 : vector<16x16x128xf32>
    %38 = arith.addf %30, %37 : vector<16x16x128xf32>
    %cst_23 = arith.constant 9.99999996E-13 : f32
    %39 = vector.broadcast %cst_23 : f32 to vector<16x16x128xf32>
    %40 = arith.addf %38, %39 : vector<16x16x128xf32>
    %41 = math.sqrt %40 : vector<16x16x128xf32>
    %c0_24 = arith.constant 0 : index
    %c0_25 = arith.constant 0 : index
    %c0_26 = arith.constant 0 : index
    %42 = vector.load %arg2[%c0_24, %c0_25, %c0_26] : memref<16x16x128xf32, #tpu.memory_space<vmem>>, vector<16x16x128xf32>
    tpu.vector_store %arg2[%c0_24, %c0_25, %c0_26], %41 {strides = array<i32>} : memref<16x16x128xf32, #tpu.memory_space<vmem>>, vector<16x16x128xf32>,
    return
  }
  func.func @transform_0(%arg0: i32) -> (i32, i32, i32) {
    %c0_i32 = arith.constant 0 : i32
    %c0_i32_0 = arith.constant 0 : i32
    %c0_i32_1 = arith.constant 0 : i32
    return %c0_i32, %c0_i32_0, %arg0 : i32, i32, i32
  }
  func.func @transform_1(%arg0: i32) -> (i32, i32, i32) {
    %c0_i32 = arith.constant 0 : i32
    %c0_i32_0 = arith.constant 0 : i32
    %c0_i32_1 = arith.constant 0 : i32
    return %c0_i32, %c0_i32_0, %arg0 : i32, i32, i32
  }
}

module attributes {stable_mosaic.version = 11 : i64} {
  func.func @kernel(%arg0: i32, %arg1: memref<16x16x128xf32, #tpu.memory_space<vmem>>, %arg2: memref<16x16x128xf32, #tpu.memory_space<vmem>>, %arg3: memref<18x16x128xf32, #tpu.memory_space<vmem>>) attributes {dimension_semantics = [#tpu.dimension_semantics<parallel>], iteration_bounds = array<i64: 1>, scalar_prefetch = 0 : i64, scratch_operands = 1 : i64, tpu.core_type = #tpu.core_type<tc>, window_params = [{transform_indices = @transform_0, window_bounds = array<i64: 16, 16, 128>}, {transform_indices = @transform_1, window_bounds = array<i64: 16, 16, 128>}]} {
    %c0 = arith.constant 0 : index
    %c0_0 = arith.constant 0 : index
    %c0_1 = arith.constant 0 : index
    %0 = vector.load %arg1[%c0, %c0_0, %c0_1] : memref<16x16x128xf32, #tpu.memory_space<vmem>>, vector<16x16x128xf32>
    %1 = arith.mulf %0, %0 : vector<16x16x128xf32>
    %cst = arith.constant 0.000000e+00 : f32
    %2 = vector.broadcast %cst : f32 to vector<16x1x128xf32>
    %3 = vector.extract_strided_slice %1 {offsets = [0, 0, 0], sizes = [16, 15, 128], strides = [1, 1, 1]} : vector<16x16x128xf32> to vector<16x15x128xf32>
    %4 = tpu.concatenate %2, %3 in 1 : vector<16x1x128xf32>, vector<16x15x128xf32> -> vector<16x16x128xf32>
    %5 = vector.extract_strided_slice %1 {offsets = [0, 1, 0], sizes = [16, 15, 128], strides = [1, 1, 1]} : vector<16x16x128xf32> to vector<16x15x128xf32>
    %6 = tpu.concatenate %5, %2 in 1 : vector<16x15x128xf32>, vector<16x1x128xf32> -> vector<16x16x128xf32>
    %cst_2 = arith.constant 5.000000e-01 : f32
    %7 = vector.broadcast %cst_2 : f32 to vector<16x16x128xf32>
    %8 = arith.mulf %7, %1 : vector<16x16x128xf32>
    %cst_3 = arith.constant 2.500000e-01 : f32
    %9 = vector.broadcast %cst_3 : f32 to vector<16x16x128xf32>
    %10 = arith.mulf %9, %4 : vector<16x16x128xf32>
    %cst_4 = arith.constant 2.500000e-01 : f32
    %11 = vector.broadcast %cst_4 : f32 to vector<16x16x128xf32>
    %12 = arith.mulf %11, %6 : vector<16x16x128xf32>
    %13 = arith.addf %10, %12 : vector<16x16x128xf32>
    %14 = arith.addf %8, %13 : vector<16x16x128xf32>
    %cst_5 = arith.constant 0.000000e+00 : f32
    %15 = vector.broadcast %cst_5 : f32 to vector<16x128xf32>
    %c0_6 = arith.constant 0 : index
    %c0_7 = arith.constant 0 : index
    %c0_8 = arith.constant 0 : index
    %16 = vector.load %arg3[%c0_6, %c0_7, %c0_8] : memref<18x16x128xf32, #tpu.memory_space<vmem>>, vector<1x16x128xf32>
    %17 = vector.shape_cast %16 : vector<1x16x128xf32> to vector<16x128xf32>
    %18 = vector.shape_cast %15 : vector<16x128xf32> to vector<1x16x128xf32>
    tpu.vector_store %arg3[%c0_6, %c0_7, %c0_8], %18 {strides = array<i32>} : memref<18x16x128xf32, #tpu.memory_space<vmem>>, vector<1x16x128xf32>,
    %c17 = arith.constant 17 : index
    %c0_9 = arith.constant 0 : index
    %c0_10 = arith.constant 0 : index
    %19 = vector.load %arg3[%c17, %c0_9, %c0_10] : memref<18x16x128xf32, #tpu.memory_space<vmem>>, vector<1x16x128xf32>
    %20 = vector.shape_cast %19 : vector<1x16x128xf32> to vector<16x128xf32>
    %21 = vector.shape_cast %15 : vector<16x128xf32> to vector<1x16x128xf32>
    tpu.vector_store %arg3[%c17, %c0_9, %c0_10], %21 {strides = array<i32>} : memref<18x16x128xf32, #tpu.memory_space<vmem>>, vector<1x16x128xf32>,
    %c1 = arith.constant 1 : index
    %c0_11 = arith.constant 0 : index
    %c0_12 = arith.constant 0 : index
    %22 = vector.load %arg3[%c1, %c0_11, %c0_12] : memref<18x16x128xf32, #tpu.memory_space<vmem>>, vector<16x16x128xf32>
    tpu.vector_store %arg3[%c1, %c0_11, %c0_12], %14 {strides = array<i32>} : memref<18x16x128xf32, #tpu.memory_space<vmem>>, vector<16x16x128xf32>,
    %cst_13 = arith.constant 5.000000e-01 : f32
    %23 = vector.broadcast %cst_13 : f32 to vector<16x16x128xf32>
    %24 = arith.mulf %23, %14 : vector<16x16x128xf32>
    %c0_14 = arith.constant 0 : index
    %c0_15 = arith.constant 0 : index
    %c0_16 = arith.constant 0 : index
    %25 = vector.load %arg3[%c0_14, %c0_15, %c0_16] : memref<18x16x128xf32, #tpu.memory_space<vmem>>, vector<16x16x128xf32>
    %cst_17 = arith.constant 2.500000e-01 : f32
    %26 = vector.broadcast %cst_17 : f32 to vector<16x16x128xf32>
    %27 = arith.mulf %26, %25 : vector<16x16x128xf32>
    %c2 = arith.constant 2 : index
    %c0_18 = arith.constant 0 : index
    %c0_19 = arith.constant 0 : index
    %28 = vector.load %arg3[%c2, %c0_18, %c0_19] : memref<18x16x128xf32, #tpu.memory_space<vmem>>, vector<16x16x128xf32>
    %cst_20 = arith.constant 2.500000e-01 : f32
    %29 = vector.broadcast %cst_20 : f32 to vector<16x16x128xf32>
    %30 = arith.mulf %29, %28 : vector<16x16x128xf32>
    %31 = arith.addf %27, %30 : vector<16x16x128xf32>
    %32 = arith.addf %24, %31 : vector<16x16x128xf32>
    %cst_21 = arith.constant 9.99999996E-13 : f32
    %33 = vector.broadcast %cst_21 : f32 to vector<16x16x128xf32>
    %34 = arith.addf %32, %33 : vector<16x16x128xf32>
    %35 = math.sqrt %34 : vector<16x16x128xf32>
    %c0_22 = arith.constant 0 : index
    %c0_23 = arith.constant 0 : index
    %c0_24 = arith.constant 0 : index
    %36 = vector.load %arg2[%c0_22, %c0_23, %c0_24] : memref<16x16x128xf32, #tpu.memory_space<vmem>>, vector<16x16x128xf32>
    tpu.vector_store %arg2[%c0_22, %c0_23, %c0_24], %35 {strides = array<i32>} : memref<16x16x128xf32, #tpu.memory_space<vmem>>, vector<16x16x128xf32>,
    return
  }
  func.func @transform_0(%arg0: i32) -> (i32, i32, i32) {
    %c0_i32 = arith.constant 0 : i32
    %c0_i32_0 = arith.constant 0 : i32
    %c0_i32_1 = arith.constant 0 : i32
    return %c0_i32, %c0_i32_0, %arg0 : i32, i32, i32
  }
  func.func @transform_1(%arg0: i32) -> (i32, i32, i32) {
    %c0_i32 = arith.constant 0 : i32
    %c0_i32_0 = arith.constant 0 : i32
    %c0_i32_1 = arith.constant 0 : i32
    return %c0_i32, %c0_i32_0, %arg0 : i32, i32, i32
  }
}

</mosaic_0001>

<llo_original>
// kernel: tpu_custom_call.1
$region0: #{tpu_custom_call.1}
  #allocation0 [shape = 'u32[]', space=smem, size = 0x4, offset = 0x4, fixed_abs, tag = 'smem constant byte address 0x4 - core index']
  #allocation1 [shape = 'u32[144,128]{1,0:T(1,128)}', space=vmem, size = 0x12000, scoped, tag = 'internal scratch']
  #allocation2 [shape = 'f32[18,16,128]{2,1,0:T(8,128)}', space=vmem, size = 0x24000, scoped, tag = 'scratch operand']
  %s0 = inlined_call_operand.hbm [shape: f32[16,16,128], index: 0, kind: input, shape index: {}]
  %s1 = inlined_call_operand.hbm [shape: f32[16,16,128], index: 1, kind: output, shape index: {}]
  %s2 = sld [smem:[#allocation0]]
  $region18: #{tpu_custom_call.1} parent=0
    _
  %s4 = ssub.s32 1, %s2
  %s5 = scalar_select 0, %s4, %s2
  $region1: #{tpu_custom_call.1} parent=0
    #allocation3 [shape = 'u8[131072]{0}', space=vmem, size = 0x20000, scoped, tag = 'input window, operand 0, single buffered']
    #allocation4 [shape = 's32[1]{0}', space=sflag, size = 0x4, scoped, tag = 'scoped memory for tpu_custom_call.1']
    #allocation5 [shape = 's32[1]{0}', space=sflag, size = 0x4, scoped, tag = 'scoped memory for tpu_custom_call.1']
    #allocation6 [shape = 'u8[131072]{0}', space=vmem, size = 0x20000, scoped, tag = 'output window, operand 0, single buffered']
    %6 = vsyncpa [#allocation4], 0
    %7 = vsyncpa [#allocation5], 0
    // Predicated region
    $region2: #{tpu_custom_call.1} parent=1 // pred_check
      _
    $region3: #{tpu_custom_call.1} parent=1 // pred_check_branch
      %9 = sbr.rel (0) target = $region5
    $region4: #{tpu_custom_call.1} parent=1 // pred_region
      %s11 = ssub.s32 4096, 4096
      %12 = vsyncadd [#allocation4], %s11
      %s13 = sshll.u32 [#allocation3], 4
      %s14 = int_to_ptr.vmem [resolvable:$true] %s13
      %19 = dma.hbm_to_vmem [thread:$0]  %s0, 4096, %s14, [#allocation4], 128, 128, 8
    $region5: #{tpu_custom_call.1} parent=1 // pred_fallthru
      _
    // Predicated region
    $region6: #{tpu_custom_call.1} parent=1 // pred_check
      _
    $region7: #{tpu_custom_call.1} parent=1 // pred_check_branch
      %21 = sbr.rel (0) target = $region9
    $region8: #{tpu_custom_call.1} parent=1 // pred_region
      %22 = dma.done [#allocation4], 4096
    $region9: #{tpu_custom_call.1} parent=1 // pred_fallthru
      _
    %v23 = vld [vmem:[#allocation3] sm:$0xff]
    %v24 = vld [vmem:[#allocation3 + $0x8] sm:$0xff]
    %v25 = vld [vmem:[#allocation3 + $0x10] sm:$0xff]
    %v26 = vld [vmem:[#allocation3 + $0x18] sm:$0xff]
    %v27 = vld [vmem:[#allocation3 + $0x20] sm:$0xff]
    %v28 = vld [vmem:[#allocation3 + $0x28] sm:$0xff]
    %v29 = vld [vmem:[#allocation3 + $0x30] sm:$0xff]
    %v30 = vld [vmem:[#allocation3 + $0x38] sm:$0xff]
    %v31 = vld [vmem:[#allocation3 + $0x40] sm:$0xff]
    %v32 = vld [vmem:[#allocation3 + $0x48] sm:$0xff]
    %v33 = vld [vmem:[#allocation3 + $0x50] sm:$0xff]
    %v34 = vld [vmem:[#allocation3 + $0x58] sm:$0xff]
    %v35 = vld [vmem:[#allocation3 + $0x60] sm:$0xff]
    %v36 = vld [vmem:[#allocation3 + $0x68] sm:$0xff]
    %v37 = vld [vmem:[#allocation3 + $0x70] sm:$0xff]
    %v38 = vld [vmem:[#allocation3 + $0x78] sm:$0xff]
    %v39 = vld [vmem:[#allocation3 + $0x80] sm:$0xff]
    %v40 = vld [vmem:[#allocation3 + $0x88] sm:$0xff]
    %v41 = vld [vmem:[#allocation3 + $0x90] sm:$0xff]
    %v42 = vld [vmem:[#allocation3 + $0x98] sm:$0xff]
    %v43 = vld [vmem:[#allocation3 + $0xa0] sm:$0xff]
    %v44 = vld [vmem:[#allocation3 + $0xa8] sm:$0xff]
    %v45 = vld [vmem:[#allocation3 + $0xb0] sm:$0xff]
    %v46 = vld [vmem:[#allocation3 + $0xb8] sm:$0xff]
    %v47 = vld [vmem:[#allocation3 + $0xc0] sm:$0xff]
    %v48 = vld [vmem:[#allocation3 + $0xc8] sm:$0xff]
    %v49 = vld [vmem:[#allocation3 + $0xd0] sm:$0xff]
    %v50 = vld [vmem:[#allocation3 + $0xd8] sm:$0xff]
    %v51 = vld [vmem:[#allocation3 + $0xe0] sm:$0xff]
    %v52 = vld [vmem:[#allocation3 + $0xe8] sm:$0xff]
    %v53 = vld [vmem:[#allocation3 + $0xf0] sm:$0xff]
    %v54 = vld [vmem:[#allocation3 + $0xf8] sm:$0xff]
    %v55 = vmul.f32 %v23, %v23
    %v56 = vmul.f32 %v24, %v24
    %v57 = vmul.f32 %v25, %v25
    %v58 = vmul.f32 %v26, %v26
    %v59 = vmul.f32 %v27, %v27
    %v60 = vmul.f32 %v28, %v28
    %v61 = vmul.f32 %v29, %v29
    %v62 = vmul.f32 %v30, %v30
    %v63 = vmul.f32 %v31, %v31
    %v64 = vmul.f32 %v32, %v32
    %v65 = vmul.f32 %v33, %v33
    %v66 = vmul.f32 %v34, %v34
    %v67 = vmul.f32 %v35, %v35
    %v68 = vmul.f32 %v36, %v36
    %v69 = vmul.f32 %v37, %v37
    %v70 = vmul.f32 %v38, %v38
    %v71 = vmul.f32 %v39, %v39
    %v72 = vmul.f32 %v40, %v40
    %v73 = vmul.f32 %v41, %v41
    %v74 = vmul.f32 %v42, %v42
    %v75 = vmul.f32 %v43, %v43
    %v76 = vmul.f32 %v44, %v44
    %v77 = vmul.f32 %v45, %v45
    %v78 = vmul.f32 %v46, %v46
    %v79 = vmul.f32 %v47, %v47
    %v80 = vmul.f32 %v48, %v48
    %v81 = vmul.f32 %v49, %v49
    %v82 = vmul.f32 %v50, %v50
    %v83 = vmul.f32 %v51, %v51
    %v84 = vmul.f32 %v52, %v52
    %v85 = vmul.f32 %v53, %v53
    %v86 = vmul.f32 %v54, %v54
    %v87 = vlaneseq
    %v88 = vshrl.u32 %v87, 7
    %v89 = vadd.s32 %v88, 8
    %vm90 = vcmp.eq.s32.totalorder %v88, 0
    %vm91 = vcmp.eq.s32.totalorder %v89, 0
    %v92 = vrot.slane %v55, 7
    %v93 = vrot.slane %v57, 7
    %v94 = vrot.slane %v59, 7
    %v95 = vrot.slane %v61, 7
    %v96 = vrot.slane %v63, 7
    %v97 = vrot.slane %v65, 7
    %v98 = vrot.slane %v67, 7
    %v99 = vrot.slane %v69, 7
    %v100 = vrot.slane %v71, 7
    %v101 = vrot.slane %v73, 7
    %v102 = vrot.slane %v75, 7
    %v103 = vrot.slane %v77, 7
    %v104 = vrot.slane %v79, 7
    %v105 = vrot.slane %v81, 7
    %v106 = vrot.slane %v83, 7
    %v107 = vrot.slane %v85, 7
    %v108 = vrot.slane %v56, 7
    %v109 = vrot.slane %v58, 7
    %v110 = vrot.slane %v60, 7
    %v111 = vrot.slane %v62, 7
    %v112 = vrot.slane %v64, 7
    %v113 = vrot.slane %v66, 7
    %v114 = vrot.slane %v68, 7
    %v115 = vrot.slane %v70, 7
    %v116 = vrot.slane %v72, 7
    %v117 = vrot.slane %v74, 7
    %v118 = vrot.slane %v76, 7
    %v119 = vrot.slane %v78, 7
    %v120 = vrot.slane %v80, 7
    %v121 = vrot.slane %v82, 7
    %v122 = vrot.slane %v84, 7
    %v123 = vrot.slane %v86, 7
    %vm124 = vcmp.lt.s32.totalorder %v88, 1
    %v125 = vsel %vm124, %v92, %v108
    %v126 = vsel %vm124, %v93, %v109
    %v127 = vsel %vm124, %v94, %v110
    %v128 = vsel %vm124, %v95, %v111
    %v129 = vsel %vm124, %v96, %v112
    %v130 = vsel %vm124, %v97, %v113
    %v131 = vsel %vm124, %v98, %v114
    %v132 = vsel %vm124, %v99, %v115
    %v133 = vsel %vm124, %v100, %v116
    %v134 = vsel %vm124, %v101, %v117
    %v135 = vsel %vm124, %v102, %v118
    %v136 = vsel %vm124, %v103, %v119
    %v137 = vsel %vm124, %v104, %v120
    %v138 = vsel %vm124, %v105, %v121
    %v139 = vsel %vm124, %v106, %v122
    %v140 = vsel %vm124, %v107, %v123
    %v141 = vsel %vm124, %v108, %v92
    %v142 = vsel %vm124, %v109, %v93
    %v143 = vsel %vm124, %v110, %v94
    %v144 = vsel %vm124, %v111, %v95
    %v145 = vsel %vm124, %v112, %v96
    %v146 = vsel %vm124, %v113, %v97
    %v147 = vsel %vm124, %v114, %v98
    %v148 = vsel %vm124, %v115, %v99
    %v149 = vsel %vm124, %v116, %v100
    %v150 = vsel %vm124, %v117, %v101
    %v151 = vsel %vm124, %v118, %v102
    %v152 = vsel %vm124, %v119, %v103
    %v153 = vsel %vm124, %v120, %v104
    %v154 = vsel %vm124, %v121, %v105
    %v155 = vsel %vm124, %v122, %v106
    %v156 = vsel %vm124, %v123, %v107
    %v157 = vsel %vm90, 0.0, %v141
    %v158 = vsel %vm91, 0.0, %v125
    %v159 = vsel %vm90, 0.0, %v142
    %v160 = vsel %vm91, 0.0, %v126
    %v161 = vsel %vm90, 0.0, %v143
    %v162 = vsel %vm91, 0.0, %v127
    %v163 = vsel %vm90, 0.0, %v144
    %v164 = vsel %vm91, 0.0, %v128
    %v165 = vsel %vm90, 0.0, %v145
    %v166 = vsel %vm91, 0.0, %v129
    %v167 = vsel %vm90, 0.0, %v146
    %v168 = vsel %vm91, 0.0, %v130
    %v169 = vsel %vm90, 0.0, %v147
    %v170 = vsel %vm91, 0.0, %v131
    %v171 = vsel %vm90, 0.0, %v148
    %v172 = vsel %vm91, 0.0, %v132
    %v173 = vsel %vm90, 0.0, %v149
    %v174 = vsel %vm91, 0.0, %v133
    %v175 = vsel %vm90, 0.0, %v150
    %v176 = vsel %vm91, 0.0, %v134
    %v177 = vsel %vm90, 0.0, %v151
    %v178 = vsel %vm91, 0.0, %v135
    %v179 = vsel %vm90, 0.0, %v152
    %v180 = vsel %vm91, 0.0, %v136
    %v181 = vsel %vm90, 0.0, %v153
    %v182 = vsel %vm91, 0.0, %v137
    %v183 = vsel %vm90, 0.0, %v154
    %v184 = vsel %vm91, 0.0, %v138
    %v185 = vsel %vm90, 0.0, %v155
    %v186 = vsel %vm91, 0.0, %v139
    %v187 = vsel %vm90, 0.0, %v156
    %v188 = vsel %vm91, 0.0, %v140
    %vm189 = vcmp.eq.s32.totalorder %v88, 15
    %vm190 = vcmp.eq.s32.totalorder %v89, 15
    %v191 = vrot.slane %v55, 1
    %v192 = vrot.slane %v57, 1
    %v193 = vrot.slane %v59, 1
    %v194 = vrot.slane %v61, 1
    %v195 = vrot.slane %v63, 1
    %v196 = vrot.slane %v65, 1
    %v197 = vrot.slane %v67, 1
    %v198 = vrot.slane %v69, 1
    %v199 = vrot.slane %v71, 1
    %v200 = vrot.slane %v73, 1
    %v201 = vrot.slane %v75, 1
    %v202 = vrot.slane %v77, 1
    %v203 = vrot.slane %v79, 1
    %v204 = vrot.slane %v81, 1
    %v205 = vrot.slane %v83, 1
    %v206 = vrot.slane %v85, 1
    %v207 = vrot.slane %v56, 1
    %v208 = vrot.slane %v58, 1
    %v209 = vrot.slane %v60, 1
    %v210 = vrot.slane %v62, 1
    %v211 = vrot.slane %v64, 1
    %v212 = vrot.slane %v66, 1
    %v213 = vrot.slane %v68, 1
    %v214 = vrot.slane %v70, 1
    %v215 = vrot.slane %v72, 1
    %v216 = vrot.slane %v74, 1
    %v217 = vrot.slane %v76, 1
    %v218 = vrot.slane %v78, 1
    %v219 = vrot.slane %v80, 1
    %v220 = vrot.slane %v82, 1
    %v221 = vrot.slane %v84, 1
    %v222 = vrot.slane %v86, 1
    %vm223 = vcmp.lt.s32.totalorder %v88, 7
    %v224 = vsel %vm223, %v191, %v207
    %v225 = vsel %vm223, %v192, %v208
    %v226 = vsel %vm223, %v193, %v209
    %v227 = vsel %vm223, %v194, %v210
    %v228 = vsel %vm223, %v195, %v211
    %v229 = vsel %vm223, %v196, %v212
    %v230 = vsel %vm223, %v197, %v213
    %v231 = vsel %vm223, %v198, %v214
    %v232 = vsel %vm223, %v199, %v215
    %v233 = vsel %vm223, %v200, %v216
    %v234 = vsel %vm223, %v201, %v217
    %v235 = vsel %vm223, %v202, %v218
    %v236 = vsel %vm223, %v203, %v219
    %v237 = vsel %vm223, %v204, %v220
    %v238 = vsel %vm223, %v205, %v221
    %v239 = vsel %vm223, %v206, %v222
    %v240 = vsel %vm223, %v207, %v191
    %v241 = vsel %vm223, %v208, %v192
    %v242 = vsel %vm223, %v209, %v193
    %v243 = vsel %vm223, %v210, %v194
    %v244 = vsel %vm223, %v211, %v195
    %v245 = vsel %vm223, %v212, %v196
    %v246 = vsel %vm223, %v213, %v197
    %v247 = vsel %vm223, %v214, %v198
    %v248 = vsel %vm223, %v215, %v199
    %v249 = vsel %vm223, %v216, %v200
    %v250 = vsel %vm223, %v217, %v201
    %v251 = vsel %vm223, %v218, %v202
    %v252 = vsel %vm223, %v219, %v203
    %v253 = vsel %vm223, %v220, %v204
    %v254 = vsel %vm223, %v221, %v205
    %v255 = vsel %vm223, %v222, %v206
    %v256 = vsel %vm189, 0.0, %v224
    %v257 = vsel %vm190, 0.0, %v240
    %v258 = vsel %vm189, 0.0, %v225
    %v259 = vsel %vm190, 0.0, %v241
    %v260 = vsel %vm189, 0.0, %v226
    %v261 = vsel %vm190, 0.0, %v242
    %v262 = vsel %vm189, 0.0, %v227
    %v263 = vsel %vm190, 0.0, %v243
    %v264 = vsel %vm189, 0.0, %v228
    %v265 = vsel %vm190, 0.0, %v244
    %v266 = vsel %vm189, 0.0, %v229
    %v267 = vsel %vm190, 0.0, %v245
    %v268 = vsel %vm189, 0.0, %v230
    %v269 = vsel %vm190, 0.0, %v246
    %v270 = vsel %vm189, 0.0, %v231
    %v271 = vsel %vm190, 0.0, %v247
    %v272 = vsel %vm189, 0.0, %v232
    %v273 = vsel %vm190, 0.0, %v248
    %v274 = vsel %vm189, 0.0, %v233
    %v275 = vsel %vm190, 0.0, %v249
    %v276 = vsel %vm189, 0.0, %v234
    %v277 = vsel %vm190, 0.0, %v250
    %v278 = vsel %vm189, 0.0, %v235
    %v279 = vsel %vm190, 0.0, %v251
    %v280 = vsel %vm189, 0.0, %v236
    %v281 = vsel %vm190, 0.0, %v252
    %v282 = vsel %vm189, 0.0, %v237
    %v283 = vsel %vm190, 0.0, %v253
    %v284 = vsel %vm189, 0.0, %v238
    %v285 = vsel %vm190, 0.0, %v254
    %v286 = vsel %vm189, 0.0, %v239
    %v287 = vsel %vm190, 0.0, %v255
    %v288 = vmul.f32 %v55, 0.5
    %v289 = vmul.f32 %v56, 0.5
    %v290 = vmul.f32 %v57, 0.5
    %v291 = vmul.f32 %v58, 0.5
    %v292 = vmul.f32 %v59, 0.5
    %v293 = vmul.f32 %v60, 0.5
    %v294 = vmul.f32 %v61, 0.5
    %v295 = vmul.f32 %v62, 0.5
    %v296 = vmul.f32 %v63, 0.5
    %v297 = vmul.f32 %v64, 0.5
    %v298 = vmul.f32 %v65, 0.5
    %v299 = vmul.f32 %v66, 0.5
    %v300 = vmul.f32 %v67, 0.5
    %v301 = vmul.f32 %v68, 0.5
    %v302 = vmul.f32 %v69, 0.5
    %v303 = vmul.f32 %v70, 0.5
    %v304 = vmul.f32 %v71, 0.5
    %v305 = vmul.f32 %v72, 0.5
    %v306 = vmul.f32 %v73, 0.5
    %v307 = vmul.f32 %v74, 0.5
    %v308 = vmul.f32 %v75, 0.5
    %v309 = vmul.f32 %v76, 0.5
    %v310 = vmul.f32 %v77, 0.5
    %v311 = vmul.f32 %v78, 0.5
    %v312 = vmul.f32 %v79, 0.5
    %v313 = vmul.f32 %v80, 0.5
    %v314 = vmul.f32 %v81, 0.5
    %v315 = vmul.f32 %v82, 0.5
    %v316 = vmul.f32 %v83, 0.5
    %v317 = vmul.f32 %v84, 0.5
    %v318 = vmul.f32 %v85, 0.5
    %v319 = vmul.f32 %v86, 0.5
    %v320 = vmul.f32 %v157, 0.25
    %v321 = vmul.f32 %v158, 0.25
    %v322 = vmul.f32 %v159, 0.25
    %v323 = vmul.f32 %v160, 0.25
    %v324 = vmul.f32 %v161, 0.25
    %v325 = vmul.f32 %v162, 0.25
    %v326 = vmul.f32 %v163, 0.25
    %v327 = vmul.f32 %v164, 0.25
    %v328 = vmul.f32 %v165, 0.25
    %v329 = vmul.f32 %v166, 0.25
    %v330 = vmul.f32 %v167, 0.25
    %v331 = vmul.f32 %v168, 0.25
    %v332 = vmul.f32 %v169, 0.25
    %v333 = vmul.f32 %v170, 0.25
    %v334 = vmul.f32 %v171, 0.25
    %v335 = vmul.f32 %v172, 0.25
    %v336 = vmul.f32 %v173, 0.25
    %v337 = vmul.f32 %v174, 0.25
    %v338 = vmul.f32 %v175, 0.25
    %v339 = vmul.f32 %v176, 0.25
    %v340 = vmul.f32 %v177, 0.25
    %v341 = vmul.f32 %v178, 0.25
    %v342 = vmul.f32 %v179, 0.25
    %v343 = vmul.f32 %v180, 0.25
    %v344 = vmul.f32 %v181, 0.25
    %v345 = vmul.f32 %v182, 0.25
    %v346 = vmul.f32 %v183, 0.25
    %v347 = vmul.f32 %v184, 0.25
    %v348 = vmul.f32 %v185, 0.25
    %v349 = vmul.f32 %v186, 0.25
    %v350 = vmul.f32 %v187, 0.25
    %v351 = vmul.f32 %v188, 0.25
    %v352 = vmul.f32 %v256, 0.25
    %v353 = vmul.f32 %v257, 0.25
    %v354 = vmul.f32 %v258, 0.25
    %v355 = vmul.f32 %v259, 0.25
    %v356 = vmul.f32 %v260, 0.25
    %v357 = vmul.f32 %v261, 0.25
    %v358 = vmul.f32 %v262, 0.25
    %v359 = vmul.f32 %v263, 0.25
    %v360 = vmul.f32 %v264, 0.25
    %v361 = vmul.f32 %v265, 0.25
    %v362 = vmul.f32 %v266, 0.25
    %v363 = vmul.f32 %v267, 0.25
    %v364 = vmul.f32 %v268, 0.25
    %v365 = vmul.f32 %v269, 0.25
    %v366 = vmul.f32 %v270, 0.25
    %v367 = vmul.f32 %v271, 0.25
    %v368 = vmul.f32 %v272, 0.25
    %v369 = vmul.f32 %v273, 0.25
    %v370 = vmul.f32 %v274, 0.25
    %v371 = vmul.f32 %v275, 0.25
    %v372 = vmul.f32 %v276, 0.25
    %v373 = vmul.f32 %v277, 0.25
    %v374 = vmul.f32 %v278, 0.25
    %v375 = vmul.f32 %v279, 0.25
    %v376 = vmul.f32 %v280, 0.25
    %v377 = vmul.f32 %v281, 0.25
    %v378 = vmul.f32 %v282, 0.25
    %v379 = vmul.f32 %v283, 0.25
    %v380 = vmul.f32 %v284, 0.25
    %v381 = vmul.f32 %v285, 0.25
    %v382 = vmul.f32 %v286, 0.25
    %v383 = vmul.f32 %v287, 0.25
    %v384 = vadd.f32 %v320, %v352
    %v385 = vadd.f32 %v321, %v353
    %v386 = vadd.f32 %v322, %v354
    %v387 = vadd.f32 %v323, %v355
    %v388 = vadd.f32 %v324, %v356
    %v389 = vadd.f32 %v325, %v357
    %v390 = vadd.f32 %v326, %v358
    %v391 = vadd.f32 %v327, %v359
    %v392 = vadd.f32 %v328, %v360
    %v393 = vadd.f32 %v329, %v361
    %v394 = vadd.f32 %v330, %v362
    %v395 = vadd.f32 %v331, %v363
    %v396 = vadd.f32 %v332, %v364
    %v397 = vadd.f32 %v333, %v365
    %v398 = vadd.f32 %v334, %v366
    %v399 = vadd.f32 %v335, %v367
    %v400 = vadd.f32 %v336, %v368
    %v401 = vadd.f32 %v337, %v369
    %v402 = vadd.f32 %v338, %v370
    %v403 = vadd.f32 %v339, %v371
    %v404 = vadd.f32 %v340, %v372
    %v405 = vadd.f32 %v341, %v373
    %v406 = vadd.f32 %v342, %v374
    %v407 = vadd.f32 %v343, %v375
    %v408 = vadd.f32 %v344, %v376
    %v409 = vadd.f32 %v345, %v377
    %v410 = vadd.f32 %v346, %v378
    %v411 = vadd.f32 %v347, %v379
    %v412 = vadd.f32 %v348, %v380
    %v413 = vadd.f32 %v349, %v381
    %v414 = vadd.f32 %v350, %v382
    %v415 = vadd.f32 %v351, %v383
    %v416 = vadd.f32 %v288, %v384
    %v417 = vadd.f32 %v289, %v385
    %v418 = vadd.f32 %v290, %v386
    %v419 = vadd.f32 %v291, %v387
    %v420 = vadd.f32 %v292, %v388
    %v421 = vadd.f32 %v293, %v389
    %v422 = vadd.f32 %v294, %v390
    %v423 = vadd.f32 %v295, %v391
    %v424 = vadd.f32 %v296, %v392
    %v425 = vadd.f32 %v297, %v393
    %v426 = vadd.f32 %v298, %v394
    %v427 = vadd.f32 %v299, %v395
    %v428 = vadd.f32 %v300, %v396
    %v429 = vadd.f32 %v301, %v397
    %v430 = vadd.f32 %v302, %v398
    %v431 = vadd.f32 %v303, %v399
    %v432 = vadd.f32 %v304, %v400
    %v433 = vadd.f32 %v305, %v401
    %v434 = vadd.f32 %v306, %v402
    %v435 = vadd.f32 %v307, %v403
    %v436 = vadd.f32 %v308, %v404
    %v437 = vadd.f32 %v309, %v405
    %v438 = vadd.f32 %v310, %v406
    %v439 = vadd.f32 %v311, %v407
    %v440 = vadd.f32 %v312, %v408
    %v441 = vadd.f32 %v313, %v409
    %v442 = vadd.f32 %v314, %v410
    %v443 = vadd.f32 %v315, %v411
    %v444 = vadd.f32 %v316, %v412
    %v445 = vadd.f32 %v317, %v413
    %v446 = vadd.f32 %v318, %v414
    %v447 = vadd.f32 %v319, %v415
    %448 = vst [vmem:[#allocation2] sm:$0xff] 0.0
    %449 = vst [vmem:[#allocation2 + $0x8] sm:$0xff] 0.0
    %s450 = scalar_lea.vmem [#allocation2], 272
    %451 = vst [vmem:[%s450] sm:$0xff] 0.0
    %452 = vst [vmem:[%s450 + $0x8] sm:$0xff] 0.0
    %s453 = scalar_lea.vmem [#allocation2], 16
    %454 = vst [vmem:[%s453] sm:$0xff] %v416
    %455 = vst [vmem:[%s453 + $0x8] sm:$0xff] %v417
    %456 = vst [vmem:[%s453 + $0x10] sm:$0xff] %v418
    %457 = vst [vmem:[%s453 + $0x18] sm:$0xff] %v419
    %458 = vst [vmem:[%s453 + $0x20] sm:$0xff] %v420
    %459 = vst [vmem:[%s453 + $0x28] sm:$0xff] %v421
    %460 = vst [vmem:[%s453 + $0x30] sm:$0xff] %v422
    %461 = vst [vmem:[%s453 + $0x38] sm:$0xff] %v423
    %462 = vst [vmem:[%s453 + $0x40] sm:$0xff] %v424
    %463 = vst [vmem:[%s453 + $0x48] sm:$0xff] %v425
    %464 = vst [vmem:[%s453 + $0x50] sm:$0xff] %v426
    %465 = vst [vmem:[%s453 + $0x58] sm:$0xff] %v427
    %466 = vst [vmem:[%s453 + $0x60] sm:$0xff] %v428
    %467 = vst [vmem:[%s453 + $0x68] sm:$0xff] %v429
    %468 = vst [vmem:[%s453 + $0x70] sm:$0xff] %v430
    %469 = vst [vmem:[%s453 + $0x78] sm:$0xff] %v431
    %470 = vst [vmem:[%s453 + $0x80] sm:$0xff] %v432
    %471 = vst [vmem:[%s453 + $0x88] sm:$0xff] %v433
    %472 = vst [vmem:[%s453 + $0x90] sm:$0xff] %v434
    %473 = vst [vmem:[%s453 + $0x98] sm:$0xff] %v435
    %474 = vst [vmem:[%s453 + $0xa0] sm:$0xff] %v436
    %475 = vst [vmem:[%s453 + $0xa8] sm:$0xff] %v437
    %476 = vst [vmem:[%s453 + $0xb0] sm:$0xff] %v438
    %477 = vst [vmem:[%s453 + $0xb8] sm:$0xff] %v439
    %478 = vst [vmem:[%s453 + $0xc0] sm:$0xff] %v440
    %479 = vst [vmem:[%s453 + $0xc8] sm:$0xff] %v441
    %480 = vst [vmem:[%s453 + $0xd0] sm:$0xff] %v442
    %481 = vst [vmem:[%s453 + $0xd8] sm:$0xff] %v443
    %482 = vst [vmem:[%s453 + $0xe0] sm:$0xff] %v444
    %483 = vst [vmem:[%s453 + $0xe8] sm:$0xff] %v445
    %484 = vst [vmem:[%s453 + $0xf0] sm:$0xff] %v446
    %485 = vst [vmem:[%s453 + $0xf8] sm:$0xff] %v447
    %v486 = vmul.f32 %v416, 0.5
    %v487 = vmul.f32 %v417, 0.5
    %v488 = vmul.f32 %v418, 0.5
    %v489 = vmul.f32 %v419, 0.5
    %v490 = vmul.f32 %v420, 0.5
    %v491 = vmul.f32 %v421, 0.5
    %v492 = vmul.f32 %v422, 0.5
    %v493 = vmul.f32 %v423, 0.5
    %v494 = vmul.f32 %v424, 0.5
    %v495 = vmul.f32 %v425, 0.5
    %v496 = vmul.f32 %v426, 0.5
    %v497 = vmul.f32 %v427, 0.5
    %v498 = vmul.f32 %v428, 0.5
    %v499 = vmul.f32 %v429, 0.5
    %v500 = vmul.f32 %v430, 0.5
    %v501 = vmul.f32 %v431, 0.5
    %v502 = vmul.f32 %v432, 0.5
    %v503 = vmul.f32 %v433, 0.5
    %v504 = vmul.f32 %v434, 0.5
    %v505 = vmul.f32 %v435, 0.5
    %v506 = vmul.f32 %v436, 0.5
    %v507 = vmul.f32 %v437, 0.5
    %v508 = vmul.f32 %v438, 0.5
    %v509 = vmul.f32 %v439, 0.5
    %v510 = vmul.f32 %v440, 0.5
    %v511 = vmul.f32 %v441, 0.5
    %v512 = vmul.f32 %v442, 0.5
    %v513 = vmul.f32 %v443, 0.5
    %v514 = vmul.f32 %v444, 0.5
    %v515 = vmul.f32 %v445, 0.5
    %v516 = vmul.f32 %v446, 0.5
    %v517 = vmul.f32 %v447, 0.5
    %v518 = vld [vmem:[#allocation2] sm:$0xff]
    %v519 = vld [vmem:[#allocation2 + $0x8] sm:$0xff]
    %v520 = vld [vmem:[#allocation2 + $0x10] sm:$0xff]
    %v521 = vld [vmem:[#allocation2 + $0x18] sm:$0xff]
    %v522 = vld [vmem:[#allocation2 + $0x20] sm:$0xff]
    %v523 = vld [vmem:[#allocation2 + $0x28] sm:$0xff]
    %v524 = vld [vmem:[#allocation2 + $0x30] sm:$0xff]
    %v525 = vld [vmem:[#allocation2 + $0x38] sm:$0xff]
    %v526 = vld [vmem:[#allocation2 + $0x40] sm:$0xff]
    %v527 = vld [vmem:[#allocation2 + $0x48] sm:$0xff]
    %v528 = vld [vmem:[#allocation2 + $0x50] sm:$0xff]
    %v529 = vld [vmem:[#allocation2 + $0x58] sm:$0xff]
    %v530 = vld [vmem:[#allocation2 + $0x60] sm:$0xff]
    %v531 = vld [vmem:[#allocation2 + $0x68] sm:$0xff]
    %v532 = vld [vmem:[#allocation2 + $0x70] sm:$0xff]
    %v533 = vld [vmem:[#allocation2 + $0x78] sm:$0xff]
    %v534 = vld [vmem:[#allocation2 + $0x80] sm:$0xff]
    %v535 = vld [vmem:[#allocation2 + $0x88] sm:$0xff]
    %v536 = vld [vmem:[#allocation2 + $0x90] sm:$0xff]
    %v537 = vld [vmem:[#allocation2 + $0x98] sm:$0xff]
    %v538 = vld [vmem:[#allocation2 + $0xa0] sm:$0xff]
    %v539 = vld [vmem:[#allocation2 + $0xa8] sm:$0xff]
    %v540 = vld [vmem:[#allocation2 + $0xb0] sm:$0xff]
    %v541 = vld [vmem:[#allocation2 + $0xb8] sm:$0xff]
    %v542 = vld [vmem:[#allocation2 + $0xc0] sm:$0xff]
    %v543 = vld [vmem:[#allocation2 + $0xc8] sm:$0xff]
    %v544 = vld [vmem:[#allocation2 + $0xd0] sm:$0xff]
    %v545 = vld [vmem:[#allocation2 + $0xd8] sm:$0xff]
    %v546 = vld [vmem:[#allocation2 + $0xe0] sm:$0xff]
    %v547 = vld [vmem:[#allocation2 + $0xe8] sm:$0xff]
    %v548 = vld [vmem:[#allocation2 + $0xf0] sm:$0xff]
    %v549 = vld [vmem:[#allocation2 + $0xf8] sm:$0xff]
    %v550 = vmul.f32 %v518, 0.25
    %v551 = vmul.f32 %v519, 0.25
    %v552 = vmul.f32 %v520, 0.25
    %v553 = vmul.f32 %v521, 0.25
    %v554 = vmul.f32 %v522, 0.25
    %v555 = vmul.f32 %v523, 0.25
    %v556 = vmul.f32 %v524, 0.25
    %v557 = vmul.f32 %v525, 0.25
    %v558 = vmul.f32 %v526, 0.25
    %v559 = vmul.f32 %v527, 0.25
    %v560 = vmul.f32 %v528, 0.25
    %v561 = vmul.f32 %v529, 0.25
    %v562 = vmul.f32 %v530, 0.25
    %v563 = vmul.f32 %v531, 0.25
    %v564 = vmul.f32 %v532, 0.25
    %v565 = vmul.f32 %v533, 0.25
    %v566 = vmul.f32 %v534, 0.25
    %v567 = vmul.f32 %v535, 0.25
    %v568 = vmul.f32 %v536, 0.25
    %v569 = vmul.f32 %v537, 0.25
    %v570 = vmul.f32 %v538, 0.25
    %v571 = vmul.f32 %v539, 0.25
    %v572 = vmul.f32 %v540, 0.25
    %v573 = vmul.f32 %v541, 0.25
    %v574 = vmul.f32 %v542, 0.25
    %v575 = vmul.f32 %v543, 0.25
    %v576 = vmul.f32 %v544, 0.25
    %v577 = vmul.f32 %v545, 0.25
    %v578 = vmul.f32 %v546, 0.25
    %v579 = vmul.f32 %v547, 0.25
    %v580 = vmul.f32 %v548, 0.25
    %v581 = vmul.f32 %v549, 0.25
    %s582 = scalar_lea.vmem [#allocation2], 32
    %v583 = vld [vmem:[%s582] sm:$0xff]
    %v584 = vld [vmem:[%s582 + $0x8] sm:$0xff]
    %v585 = vld [vmem:[%s582 + $0x10] sm:$0xff]
    %v586 = vld [vmem:[%s582 + $0x18] sm:$0xff]
    %v587 = vld [vmem:[%s582 + $0x20] sm:$0xff]
    %v588 = vld [vmem:[%s582 + $0x28] sm:$0xff]
    %v589 = vld [vmem:[%s582 + $0x30] sm:$0xff]
    %v590 = vld [vmem:[%s582 + $0x38] sm:$0xff]
    %v591 = vld [vmem:[%s582 + $0x40] sm:$0xff]
    %v592 = vld [vmem:[%s582 + $0x48] sm:$0xff]
    %v593 = vld [vmem:[%s582 + $0x50] sm:$0xff]
    %v594 = vld [vmem:[%s582 + $0x58] sm:$0xff]
    %v595 = vld [vmem:[%s582 + $0x60] sm:$0xff]
    %v596 = vld [vmem:[%s582 + $0x68] sm:$0xff]
    %v597 = vld [vmem:[%s582 + $0x70] sm:$0xff]
    %v598 = vld [vmem:[%s582 + $0x78] sm:$0xff]
    %v599 = vld [vmem:[%s582 + $0x80] sm:$0xff]
    %v600 = vld [vmem:[%s582 + $0x88] sm:$0xff]
    %v601 = vld [vmem:[%s582 + $0x90] sm:$0xff]
    %v602 = vld [vmem:[%s582 + $0x98] sm:$0xff]
    %v603 = vld [vmem:[%s582 + $0xa0] sm:$0xff]
    %v604 = vld [vmem:[%s582 + $0xa8] sm:$0xff]
    %v605 = vld [vmem:[%s582 + $0xb0] sm:$0xff]
    %v606 = vld [vmem:[%s582 + $0xb8] sm:$0xff]
    %v607 = vld [vmem:[%s582 + $0xc0] sm:$0xff]
    %v608 = vld [vmem:[%s582 + $0xc8] sm:$0xff]
    %v609 = vld [vmem:[%s582 + $0xd0] sm:$0xff]
    %v610 = vld [vmem:[%s582 + $0xd8] sm:$0xff]
    %v611 = vld [vmem:[%s582 + $0xe0] sm:$0xff]
    %v612 = vld [vmem:[%s582 + $0xe8] sm:$0xff]
    %v613 = vld [vmem:[%s582 + $0xf0] sm:$0xff]
    %v614 = vld [vmem:[%s582 + $0xf8] sm:$0xff]
    %v615 = vmul.f32 %v583, 0.25
    %v616 = vmul.f32 %v584, 0.25
    %v617 = vmul.f32 %v585, 0.25
    %v618 = vmul.f32 %v586, 0.25
    %v619 = vmul.f32 %v587, 0.25
    %v620 = vmul.f32 %v588, 0.25
    %v621 = vmul.f32 %v589, 0.25
    %v622 = vmul.f32 %v590, 0.25
    %v623 = vmul.f32 %v591, 0.25
    %v624 = vmul.f32 %v592, 0.25
    %v625 = vmul.f32 %v593, 0.25
    %v626 = vmul.f32 %v594, 0.25
    %v627 = vmul.f32 %v595, 0.25
    %v628 = vmul.f32 %v596, 0.25
    %v629 = vmul.f32 %v597, 0.25
    %v630 = vmul.f32 %v598, 0.25
    %v631 = vmul.f32 %v599, 0.25
    %v632 = vmul.f32 %v600, 0.25
    %v633 = vmul.f32 %v601, 0.25
    %v634 = vmul.f32 %v602, 0.25
    %v635 = vmul.f32 %v603, 0.25
    %v636 = vmul.f32 %v604, 0.25
    %v637 = vmul.f32 %v605, 0.25
    %v638 = vmul.f32 %v606, 0.25
    %v639 = vmul.f32 %v607, 0.25
    %v640 = vmul.f32 %v608, 0.25
    %v641 = vmul.f32 %v609, 0.25
    %v642 = vmul.f32 %v610, 0.25
    %v643 = vmul.f32 %v611, 0.25
    %v644 = vmul.f32 %v612, 0.25
    %v645 = vmul.f32 %v613, 0.25
    %v646 = vmul.f32 %v614, 0.25
    %v647 = vadd.f32 %v550, %v615
    %v648 = vadd.f32 %v551, %v616
    %v649 = vadd.f32 %v552, %v617
    %v650 = vadd.f32 %v553, %v618
    %v651 = vadd.f32 %v554, %v619
    %v652 = vadd.f32 %v555, %v620
    %v653 = vadd.f32 %v556, %v621
    %v654 = vadd.f32 %v557, %v622
    %v655 = vadd.f32 %v558, %v623
    %v656 = vadd.f32 %v559, %v624
    %v657 = vadd.f32 %v560, %v625
    %v658 = vadd.f32 %v561, %v626
    %v659 = vadd.f32 %v562, %v627
    %v660 = vadd.f32 %v563, %v628
    %v661 = vadd.f32 %v564, %v629
    %v662 = vadd.f32 %v565, %v630
    %v663 = vadd.f32 %v566, %v631
    %v664 = vadd.f32 %v567, %v632
    %v665 = vadd.f32 %v568, %v633
    %v666 = vadd.f32 %v569, %v634
    %v667 = vadd.f32 %v570, %v635
    %v668 = vadd.f32 %v571, %v636
    %v669 = vadd.f32 %v572, %v637
    %v670 = vadd.f32 %v573, %v638
    %v671 = vadd.f32 %v574, %v639
    %v672 = vadd.f32 %v575, %v640
    %v673 = vadd.f32 %v576, %v641
    %v674 = vadd.f32 %v577, %v642
    %v675 = vadd.f32 %v578, %v643
    %v676 = vadd.f32 %v579, %v644
    %v677 = vadd.f32 %v580, %v645
    %v678 = vadd.f32 %v581, %v646
    %v679 = vadd.f32 %v486, %v647
    %v680 = vadd.f32 %v487, %v648
    %v681 = vadd.f32 %v488, %v649
    %v682 = vadd.f32 %v489, %v650
    %v683 = vadd.f32 %v490, %v651
    %v684 = vadd.f32 %v491, %v652
    %v685 = vadd.f32 %v492, %v653
    %v686 = vadd.f32 %v493, %v654
    %v687 = vadd.f32 %v494, %v655
    %v688 = vadd.f32 %v495, %v656
    %v689 = vadd.f32 %v496, %v657
    %v690 = vadd.f32 %v497, %v658
    %v691 = vadd.f32 %v498, %v659
    %v692 = vadd.f32 %v499, %v660
    %v693 = vadd.f32 %v500, %v661
    %v694 = vadd.f32 %v501, %v662
    %v695 = vadd.f32 %v502, %v663
    %v696 = vadd.f32 %v503, %v664
    %v697 = vadd.f32 %v504, %v665
    %v698 = vadd.f32 %v505, %v666
    %v699 = vadd.f32 %v506, %v667
    %v700 = vadd.f32 %v507, %v668
    %v701 = vadd.f32 %v508, %v669
    %v702 = vadd.f32 %v509, %v670
    %v703 = vadd.f32 %v510, %v671
    %v704 = vadd.f32 %v511, %v672
    %v705 = vadd.f32 %v512, %v673
    %v706 = vadd.f32 %v513, %v674
    %v707 = vadd.f32 %v514, %v675
    %v708 = vadd.f32 %v515, %v676
    %v709 = vadd.f32 %v516, %v677
    %v710 = vadd.f32 %v517, %v678
    %v711 = vadd.f32 %v679, 1e-12
    %v712 = vadd.f32 %v680, 1e-12
    %v713 = vadd.f32 %v681, 1e-12
    %v714 = vadd.f32 %v682, 1e-12
    %v715 = vadd.f32 %v683, 1e-12
    %v716 = vadd.f32 %v684, 1e-12
    %v717 = vadd.f32 %v685, 1e-12
    %v718 = vadd.f32 %v686, 1e-12
    %v719 = vadd.f32 %v687, 1e-12
    %v720 = vadd.f32 %v688, 1e-12
    %v721 = vadd.f32 %v689, 1e-12
    %v722 = vadd.f32 %v690, 1e-12
    %v723 = vadd.f32 %v691, 1e-12
    %v724 = vadd.f32 %v692, 1e-12
    %v725 = vadd.f32 %v693, 1e-12
    %v726 = vadd.f32 %v694, 1e-12
    %v727 = vadd.f32 %v695, 1e-12
    %v728 = vadd.f32 %v696, 1e-12
    %v729 = vadd.f32 %v697, 1e-12
    %v730 = vadd.f32 %v698, 1e-12
    %v731 = vadd.f32 %v699, 1e-12
    %v732 = vadd.f32 %v700, 1e-12
    %v733 = vadd.f32 %v701, 1e-12
    %v734 = vadd.f32 %v702, 1e-12
    %v735 = vadd.f32 %v703, 1e-12
    %v736 = vadd.f32 %v704, 1e-12
    %v737 = vadd.f32 %v705, 1e-12
    %v738 = vadd.f32 %v706, 1e-12
    %v739 = vadd.f32 %v707, 1e-12
    %v740 = vadd.f32 %v708, 1e-12
    %v741 = vadd.f32 %v709, 1e-12
    %v742 = vadd.f32 %v710, 1e-12
    %v743 = vrsqrt.pop %v711
    %v744 = vmul.f32 %v711, %v743
    %vm745 = vcmp.eq.f32.partialorder %v711, inf
    %v746 = vsel %vm745, %v711, %v744
    %vm747 = vcmp.eq.f32.partialorder %v711, 0.0
    %v748 = vand.u32 %v711, 2147483648
    %v749 = vsel %vm747, %v748, %v746
    %v750 = vrsqrt.pop %v712
    %v751 = vmul.f32 %v712, %v750
    %vm752 = vcmp.eq.f32.partialorder %v712, inf
    %v753 = vsel %vm752, %v712, %v751
    %vm754 = vcmp.eq.f32.partialorder %v712, 0.0
    %v755 = vand.u32 %v712, 2147483648
    %v756 = vsel %vm754, %v755, %v753
    %v757 = vrsqrt.pop %v713
    %v758 = vmul.f32 %v713, %v757
    %vm759 = vcmp.eq.f32.partialorder %v713, inf
    %v760 = vsel %vm759, %v713, %v758
    %vm761 = vcmp.eq.f32.partialorder %v713, 0.0
    %v762 = vand.u32 %v713, 2147483648
    %v763 = vsel %vm761, %v762, %v760
    %v764 = vrsqrt.pop %v714
    %v765 = vmul.f32 %v714, %v764
    %vm766 = vcmp.eq.f32.partialorder %v714, inf
    %v767 = vsel %vm766, %v714, %v765
    %vm768 = vcmp.eq.f32.partialorder %v714, 0.0
    %v769 = vand.u32 %v714, 2147483648
    %v770 = vsel %vm768, %v769, %v767
    %v771 = vrsqrt.pop %v715
    %v772 = vmul.f32 %v715, %v771
    %vm773 = vcmp.eq.f32.partialorder %v715, inf
    %v774 = vsel %vm773, %v715, %v772
    %vm775 = vcmp.eq.f32.partialorder %v715, 0.0
    %v776 = vand.u32 %v715, 2147483648
    %v777 = vsel %vm775, %v776, %v774
    %v778 = vrsqrt.pop %v716
    %v779 = vmul.f32 %v716, %v778
    %vm780 = vcmp.eq.f32.partialorder %v716, inf
    %v781 = vsel %vm780, %v716, %v779
    %vm782 = vcmp.eq.f32.partialorder %v716, 0.0
    %v783 = vand.u32 %v716, 2147483648
    %v784 = vsel %vm782, %v783, %v781
    %v785 = vrsqrt.pop %v717
    %v786 = vmul.f32 %v717, %v785
    %vm787 = vcmp.eq.f32.partialorder %v717, inf
    %v788 = vsel %vm787, %v717, %v786
    %vm789 = vcmp.eq.f32.partialorder %v717, 0.0
    %v790 = vand.u32 %v717, 2147483648
    %v791 = vsel %vm789, %v790, %v788
    %v792 = vrsqrt.pop %v718
    %v793 = vmul.f32 %v718, %v792
    %vm794 = vcmp.eq.f32.partialorder %v718, inf
    %v795 = vsel %vm794, %v718, %v793
    %vm796 = vcmp.eq.f32.partialorder %v718, 0.0
    %v797 = vand.u32 %v718, 2147483648
    %v798 = vsel %vm796, %v797, %v795
    %v799 = vrsqrt.pop %v719
    %v800 = vmul.f32 %v719, %v799
    %vm801 = vcmp.eq.f32.partialorder %v719, inf
    %v802 = vsel %vm801, %v719, %v800
    %vm803 = vcmp.eq.f32.partialorder %v719, 0.0
    %v804 = vand.u32 %v719, 2147483648
    %v805 = vsel %vm803, %v804, %v802
    %v806 = vrsqrt.pop %v720
    %v807 = vmul.f32 %v720, %v806
    %vm808 = vcmp.eq.f32.partialorder %v720, inf
    %v809 = vsel %vm808, %v720, %v807
    %vm810 = vcmp.eq.f32.partialorder %v720, 0.0
    %v811 = vand.u32 %v720, 2147483648
    %v812 = vsel %vm810, %v811, %v809
    %v813 = vrsqrt.pop %v721
    %v814 = vmul.f32 %v721, %v813
    %vm815 = vcmp.eq.f32.partialorder %v721, inf
    %v816 = vsel %vm815, %v721, %v814
    %vm817 = vcmp.eq.f32.partialorder %v721, 0.0
    %v818 = vand.u32 %v721, 2147483648
    %v819 = vsel %vm817, %v818, %v816
    %v820 = vrsqrt.pop %v722
    %v821 = vmul.f32 %v722, %v820
    %vm822 = vcmp.eq.f32.partialorder %v722, inf
    %v823 = vsel %vm822, %v722, %v821
    %vm824 = vcmp.eq.f32.partialorder %v722, 0.0
    %v825 = vand.u32 %v722, 2147483648
    %v826 = vsel %vm824, %v825, %v823
    %v827 = vrsqrt.pop %v723
    %v828 = vmul.f32 %v723, %v827
    %vm829 = vcmp.eq.f32.partialorder %v723, inf
    %v830 = vsel %vm829, %v723, %v828
    %vm831 = vcmp.eq.f32.partialorder %v723, 0.0
    %v832 = vand.u32 %v723, 2147483648
    %v833 = vsel %vm831, %v832, %v830
    %v834 = vrsqrt.pop %v724
    %v835 = vmul.f32 %v724, %v834
    %vm836 = vcmp.eq.f32.partialorder %v724, inf
    %v837 = vsel %vm836, %v724, %v835
    %vm838 = vcmp.eq.f32.partialorder %v724, 0.0
    %v839 = vand.u32 %v724, 2147483648
    %v840 = vsel %vm838, %v839, %v837
    %v841 = vrsqrt.pop %v725
    %v842 = vmul.f32 %v725, %v841
    %vm843 = vcmp.eq.f32.partialorder %v725, inf
    %v844 = vsel %vm843, %v725, %v842
    %vm845 = vcmp.eq.f32.partialorder %v725, 0.0
    %v846 = vand.u32 %v725, 2147483648
    %v847 = vsel %vm845, %v846, %v844
    %v848 = vrsqrt.pop %v726
    %v849 = vmul.f32 %v726, %v848
    %vm850 = vcmp.eq.f32.partialorder %v726, inf
    %v851 = vsel %vm850, %v726, %v849
    %vm852 = vcmp.eq.f32.partialorder %v726, 0.0
    %v853 = vand.u32 %v726, 2147483648
    %v854 = vsel %vm852, %v853, %v851
    %v855 = vrsqrt.pop %v727
    %v856 = vmul.f32 %v727, %v855
    %vm857 = vcmp.eq.f32.partialorder %v727, inf
    %v858 = vsel %vm857, %v727, %v856
    %vm859 = vcmp.eq.f32.partialorder %v727, 0.0
    %v860 = vand.u32 %v727, 2147483648
    %v861 = vsel %vm859, %v860, %v858
    %v862 = vrsqrt.pop %v728
    %v863 = vmul.f32 %v728, %v862
    %vm864 = vcmp.eq.f32.partialorder %v728, inf
    %v865 = vsel %vm864, %v728, %v863
    %vm866 = vcmp.eq.f32.partialorder %v728, 0.0
    %v867 = vand.u32 %v728, 2147483648
    %v868 = vsel %vm866, %v867, %v865
    %v869 = vrsqrt.pop %v729
    %v870 = vmul.f32 %v729, %v869
    %vm871 = vcmp.eq.f32.partialorder %v729, inf
    %v872 = vsel %vm871, %v729, %v870
    %vm873 = vcmp.eq.f32.partialorder %v729, 0.0
    %v874 = vand.u32 %v729, 2147483648
    %v875 = vsel %vm873, %v874, %v872
    %v876 = vrsqrt.pop %v730
    %v877 = vmul.f32 %v730, %v876
    %vm878 = vcmp.eq.f32.partialorder %v730, inf
    %v879 = vsel %vm878, %v730, %v877
    %vm880 = vcmp.eq.f32.partialorder %v730, 0.0
    %v881 = vand.u32 %v730, 2147483648
    %v882 = vsel %vm880, %v881, %v879
    %v883 = vrsqrt.pop %v731
    %v884 = vmul.f32 %v731, %v883
    %vm885 = vcmp.eq.f32.partialorder %v731, inf
    %v886 = vsel %vm885, %v731, %v884
    %vm887 = vcmp.eq.f32.partialorder %v731, 0.0
    %v888 = vand.u32 %v731, 2147483648
    %v889 = vsel %vm887, %v888, %v886
    %v890 = vrsqrt.pop %v732
    %v891 = vmul.f32 %v732, %v890
    %vm892 = vcmp.eq.f32.partialorder %v732, inf
    %v893 = vsel %vm892, %v732, %v891
    %vm894 = vcmp.eq.f32.partialorder %v732, 0.0
    %v895 = vand.u32 %v732, 2147483648
    %v896 = vsel %vm894, %v895, %v893
    %v897 = vrsqrt.pop %v733
    %v898 = vmul.f32 %v733, %v897
    %vm899 = vcmp.eq.f32.partialorder %v733, inf
    %v900 = vsel %vm899, %v733, %v898
    %vm901 = vcmp.eq.f32.partialorder %v733, 0.0
    %v902 = vand.u32 %v733, 2147483648
    %v903 = vsel %vm901, %v902, %v900
    %v904 = vrsqrt.pop %v734
    %v905 = vmul.f32 %v734, %v904
    %vm906 = vcmp.eq.f32.partialorder %v734, inf
    %v907 = vsel %vm906, %v734, %v905
    %vm908 = vcmp.eq.f32.partialorder %v734, 0.0
    %v909 = vand.u32 %v734, 2147483648
    %v910 = vsel %vm908, %v909, %v907
    %v911 = vrsqrt.pop %v735
    %v912 = vmul.f32 %v735, %v911
    %vm913 = vcmp.eq.f32.partialorder %v735, inf
    %v914 = vsel %vm913, %v735, %v912
    %vm915 = vcmp.eq.f32.partialorder %v735, 0.0
    %v916 = vand.u32 %v735, 2147483648
    %v917 = vsel %vm915, %v916, %v914
    %v918 = vrsqrt.pop %v736
    %v919 = vmul.f32 %v736, %v918
    %vm920 = vcmp.eq.f32.partialorder %v736, inf
    %v921 = vsel %vm920, %v736, %v919
    %vm922 = vcmp.eq.f32.partialorder %v736, 0.0
    %v923 = vand.u32 %v736, 2147483648
    %v924 = vsel %vm922, %v923, %v921
    %v925 = vrsqrt.pop %v737
    %v926 = vmul.f32 %v737, %v925
    %vm927 = vcmp.eq.f32.partialorder %v737, inf
    %v928 = vsel %vm927, %v737, %v926
    %vm929 = vcmp.eq.f32.partialorder %v737, 0.0
    %v930 = vand.u32 %v737, 2147483648
    %v931 = vsel %vm929, %v930, %v928
    %v932 = vrsqrt.pop %v738
    %v933 = vmul.f32 %v738, %v932
    %vm934 = vcmp.eq.f32.partialorder %v738, inf
    %v935 = vsel %vm934, %v738, %v933
    %vm936 = vcmp.eq.f32.partialorder %v738, 0.0
    %v937 = vand.u32 %v738, 2147483648
    %v938 = vsel %vm936, %v937, %v935
    %v939 = vrsqrt.pop %v739
    %v940 = vmul.f32 %v739, %v939
    %vm941 = vcmp.eq.f32.partialorder %v739, inf
    %v942 = vsel %vm941, %v739, %v940
    %vm943 = vcmp.eq.f32.partialorder %v739, 0.0
    %v944 = vand.u32 %v739, 2147483648
    %v945 = vsel %vm943, %v944, %v942
    %v946 = vrsqrt.pop %v740
    %v947 = vmul.f32 %v740, %v946
    %vm948 = vcmp.eq.f32.partialorder %v740, inf
    %v949 = vsel %vm948, %v740, %v947
    %vm950 = vcmp.eq.f32.partialorder %v740, 0.0
    %v951 = vand.u32 %v740, 2147483648
    %v952 = vsel %vm950, %v951, %v949
    %v953 = vrsqrt.pop %v741
    %v954 = vmul.f32 %v741, %v953
    %vm955 = vcmp.eq.f32.partialorder %v741, inf
    %v956 = vsel %vm955, %v741, %v954
    %vm957 = vcmp.eq.f32.partialorder %v741, 0.0
    %v958 = vand.u32 %v741, 2147483648
    %v959 = vsel %vm957, %v958, %v956
    %v960 = vrsqrt.pop %v742
    %v961 = vmul.f32 %v742, %v960
    %vm962 = vcmp.eq.f32.partialorder %v742, inf
    %v963 = vsel %vm962, %v742, %v961
    %vm964 = vcmp.eq.f32.partialorder %v742, 0.0
    %v965 = vand.u32 %v742, 2147483648
    %v966 = vsel %vm964, %v965, %v963
    %967 = vst [vmem:[#allocation6] sm:$0xff] %v749
    %968 = vst [vmem:[#allocation6 + $0x8] sm:$0xff] %v756
    %969 = vst [vmem:[#allocation6 + $0x10] sm:$0xff] %v763
    %970 = vst [vmem:[#allocation6 + $0x18] sm:$0xff] %v770
    %971 = vst [vmem:[#allocation6 + $0x20] sm:$0xff] %v777
    %972 = vst [vmem:[#allocation6 + $0x28] sm:$0xff] %v784
    %973 = vst [vmem:[#allocation6 + $0x30] sm:$0xff] %v791
    %974 = vst [vmem:[#allocation6 + $0x38] sm:$0xff] %v798
    %975 = vst [vmem:[#allocation6 + $0x40] sm:$0xff] %v805
    %976 = vst [vmem:[#allocation6 + $0x48] sm:$0xff] %v812
    %977 = vst [vmem:[#allocation6 + $0x50] sm:$0xff] %v819
    %978 = vst [vmem:[#allocation6 + $0x58] sm:$0xff] %v826
    %979 = vst [vmem:[#allocation6 + $0x60] sm:$0xff] %v833
    %980 = vst [vmem:[#allocation6 + $0x68] sm:$0xff] %v840
    %981 = vst [vmem:[#allocation6 + $0x70] sm:$0xff] %v847
    %982 = vst [vmem:[#allocation6 + $0x78] sm:$0xff] %v854
    %983 = vst [vmem:[#allocation6 + $0x80] sm:$0xff] %v861
    %984 = vst [vmem:[#allocation6 + $0x88] sm:$0xff] %v868
    %985 = vst [vmem:[#allocation6 + $0x90] sm:$0xff] %v875
    %986 = vst [vmem:[#allocation6 + $0x98] sm:$0xff] %v882
    %987 = vst [vmem:[#allocation6 + $0xa0] sm:$0xff] %v889
    %988 = vst [vmem:[#allocation6 + $0xa8] sm:$0xff] %v896
    %989 = vst [vmem:[#allocation6 + $0xb0] sm:$0xff] %v903
    %990 = vst [vmem:[#allocation6 + $0xb8] sm:$0xff] %v910
    %991 = vst [vmem:[#allocation6 + $0xc0] sm:$0xff] %v917
    %992 = vst [vmem:[#allocation6 + $0xc8] sm:$0xff] %v924
    %993 = vst [vmem:[#allocation6 + $0xd0] sm:$0xff] %v931
    %994 = vst [vmem:[#allocation6 + $0xd8] sm:$0xff] %v938
    %995 = vst [vmem:[#allocation6 + $0xe0] sm:$0xff] %v945
    %996 = vst [vmem:[#allocation6 + $0xe8] sm:$0xff] %v952
    %997 = vst [vmem:[#allocation6 + $0xf0] sm:$0xff] %v959
    %998 = vst [vmem:[#allocation6 + $0xf8] sm:$0xff] %v966
    // Predicated region
    $region10: #{tpu_custom_call.1} parent=1 // pred_check
      _
    $region11: #{tpu_custom_call.1} parent=1 // pred_check_branch
      %1000 = sbr.rel (0) target = $region13
    $region12: #{tpu_custom_call.1} parent=1 // pred_region
      %s1002 = ssub.s32 4096, 4096
      %1003 = vsyncadd [#allocation5], %s1002
      %s1004 = sshll.u32 [#allocation6], 4
      %s1005 = int_to_ptr.vmem [resolvable:$true] %s1004
      %1010 = dma.vmem_to_hbm [thread:$0]  %s1005, 4096, %s1, [#allocation5], 128, 128, 8
    $region13: #{tpu_custom_call.1} parent=1 // pred_fallthru
      _
    // Predicated region
    $region14: #{tpu_custom_call.1} parent=1 // pred_check
      _
    $region15: #{tpu_custom_call.1} parent=1 // pred_check_branch
      %1012 = sbr.rel (0) target = $region17
    $region16: #{tpu_custom_call.1} parent=1 // pred_region
      %1013 = dma.done [#allocation5], 4096
    $region17: #{tpu_custom_call.1} parent=1 // pred_fallthru
      _
    %1014 = vsyncpa [#allocation4], 1
    %1015 = vsyncpa [#allocation5], 1

// kernel: tpu_custom_call.1
$region0: #{tpu_custom_call.1}
  #allocation0 [shape = 'u32[]', space=smem, size = 0x4, offset = 0x4, fixed_abs, tag = 'smem constant byte address 0x4 - core index']
  #allocation1 [shape = 'u32[144,128]{1,0:T(1,128)}', space=vmem, size = 0x12000, scoped, tag = 'internal scratch']
  #allocation2 [shape = 'f32[18,16,128]{2,1,0:T(8,128)}', space=vmem, size = 0x24000, scoped, tag = 'scratch operand']
  %s0 = inlined_call_operand.hbm [shape: f32[16,16,128], index: 0, kind: input, shape index: {}]
  %s1 = inlined_call_operand.hbm [shape: f32[16,16,128], index: 1, kind: output, shape index: {}]
  %s2 = sld [smem:[#allocation0]]
  $region18: #{tpu_custom_call.1} parent=0
    _
  %s4 = ssub.s32 1, %s2
  %s5 = scalar_select 0, %s4, %s2
  $region1: #{tpu_custom_call.1} parent=0
    #allocation3 [shape = 'u8[131072]{0}', space=vmem, size = 0x20000, scoped, tag = 'input window, operand 0, single buffered']
    #allocation4 [shape = 's32[1]{0}', space=sflag, size = 0x4, scoped, tag = 'scoped memory for tpu_custom_call.1']
    #allocation5 [shape = 's32[1]{0}', space=sflag, size = 0x4, scoped, tag = 'scoped memory for tpu_custom_call.1']
    #allocation6 [shape = 'u8[131072]{0}', space=vmem, size = 0x20000, scoped, tag = 'output window, operand 0, single buffered']
    %6 = vsyncpa [#allocation4], 0
    %7 = vsyncpa [#allocation5], 0
    // Predicated region
    $region2: #{tpu_custom_call.1} parent=1 // pred_check
      _
    $region3: #{tpu_custom_call.1} parent=1 // pred_check_branch
      %9 = sbr.rel (0) target = $region5
    $region4: #{tpu_custom_call.1} parent=1 // pred_region
      %s11 = ssub.s32 4096, 4096
      %12 = vsyncadd [#allocation4], %s11
      %s13 = sshll.u32 [#allocation3], 4
      %s14 = int_to_ptr.vmem [resolvable:$true] %s13
      %19 = dma.hbm_to_vmem [thread:$0]  %s0, 4096, %s14, [#allocation4], 128, 128, 8
    $region5: #{tpu_custom_call.1} parent=1 // pred_fallthru
      _
    // Predicated region
    $region6: #{tpu_custom_call.1} parent=1 // pred_check
      _
    $region7: #{tpu_custom_call.1} parent=1 // pred_check_branch
      %21 = sbr.rel (0) target = $region9
    $region8: #{tpu_custom_call.1} parent=1 // pred_region
      %22 = dma.done [#allocation4], 4096
    $region9: #{tpu_custom_call.1} parent=1 // pred_fallthru
      _
    %v23 = vld [vmem:[#allocation3] sm:$0xff]
    %v24 = vld [vmem:[#allocation3 + $0x8] sm:$0xff]
    %v25 = vld [vmem:[#allocation3 + $0x10] sm:$0xff]
    %v26 = vld [vmem:[#allocation3 + $0x18] sm:$0xff]
    %v27 = vld [vmem:[#allocation3 + $0x20] sm:$0xff]
    %v28 = vld [vmem:[#allocation3 + $0x28] sm:$0xff]
    %v29 = vld [vmem:[#allocation3 + $0x30] sm:$0xff]
    %v30 = vld [vmem:[#allocation3 + $0x38] sm:$0xff]
    %v31 = vld [vmem:[#allocation3 + $0x40] sm:$0xff]
    %v32 = vld [vmem:[#allocation3 + $0x48] sm:$0xff]
    %v33 = vld [vmem:[#allocation3 + $0x50] sm:$0xff]
    %v34 = vld [vmem:[#allocation3 + $0x58] sm:$0xff]
    %v35 = vld [vmem:[#allocation3 + $0x60] sm:$0xff]
    %v36 = vld [vmem:[#allocation3 + $0x68] sm:$0xff]
    %v37 = vld [vmem:[#allocation3 + $0x70] sm:$0xff]
    %v38 = vld [vmem:[#allocation3 + $0x78] sm:$0xff]
    %v39 = vld [vmem:[#allocation3 + $0x80] sm:$0xff]
    %v40 = vld [vmem:[#allocation3 + $0x88] sm:$0xff]
    %v41 = vld [vmem:[#allocation3 + $0x90] sm:$0xff]
    %v42 = vld [vmem:[#allocation3 + $0x98] sm:$0xff]
    %v43 = vld [vmem:[#allocation3 + $0xa0] sm:$0xff]
    %v44 = vld [vmem:[#allocation3 + $0xa8] sm:$0xff]
    %v45 = vld [vmem:[#allocation3 + $0xb0] sm:$0xff]
    %v46 = vld [vmem:[#allocation3 + $0xb8] sm:$0xff]
    %v47 = vld [vmem:[#allocation3 + $0xc0] sm:$0xff]
    %v48 = vld [vmem:[#allocation3 + $0xc8] sm:$0xff]
    %v49 = vld [vmem:[#allocation3 + $0xd0] sm:$0xff]
    %v50 = vld [vmem:[#allocation3 + $0xd8] sm:$0xff]
    %v51 = vld [vmem:[#allocation3 + $0xe0] sm:$0xff]
    %v52 = vld [vmem:[#allocation3 + $0xe8] sm:$0xff]
    %v53 = vld [vmem:[#allocation3 + $0xf0] sm:$0xff]
    %v54 = vld [vmem:[#allocation3 + $0xf8] sm:$0xff]
    %v55 = vmul.f32 %v23, %v23
    %v56 = vmul.f32 %v24, %v24
    %v57 = vmul.f32 %v25, %v25
    %v58 = vmul.f32 %v26, %v26
    %v59 = vmul.f32 %v27, %v27
    %v60 = vmul.f32 %v28, %v28
    %v61 = vmul.f32 %v29, %v29
    %v62 = vmul.f32 %v30, %v30
    %v63 = vmul.f32 %v31, %v31
    %v64 = vmul.f32 %v32, %v32
    %v65 = vmul.f32 %v33, %v33
    %v66 = vmul.f32 %v34, %v34
    %v67 = vmul.f32 %v35, %v35
    %v68 = vmul.f32 %v36, %v36
    %v69 = vmul.f32 %v37, %v37
    %v70 = vmul.f32 %v38, %v38
    %v71 = vmul.f32 %v39, %v39
    %v72 = vmul.f32 %v40, %v40
    %v73 = vmul.f32 %v41, %v41
    %v74 = vmul.f32 %v42, %v42
    %v75 = vmul.f32 %v43, %v43
    %v76 = vmul.f32 %v44, %v44
    %v77 = vmul.f32 %v45, %v45
    %v78 = vmul.f32 %v46, %v46
    %v79 = vmul.f32 %v47, %v47
    %v80 = vmul.f32 %v48, %v48
    %v81 = vmul.f32 %v49, %v49
    %v82 = vmul.f32 %v50, %v50
    %v83 = vmul.f32 %v51, %v51
    %v84 = vmul.f32 %v52, %v52
    %v85 = vmul.f32 %v53, %v53
    %v86 = vmul.f32 %v54, %v54
    %vm119 = vcmask 1040384
    %v120 = vrot.slane %v55, 7
    %v121 = vrot.slane %v56, 7
    %v122 = vsel %vm119, %v120, %v121
    %v123 = vrot.slane %v57, 7
    %v124 = vrot.slane %v58, 7
    %v125 = vsel %vm119, %v123, %v124
    %v126 = vrot.slane %v59, 7
    %v127 = vrot.slane %v60, 7
    %v128 = vsel %vm119, %v126, %v127
    %v129 = vrot.slane %v61, 7
    %v130 = vrot.slane %v62, 7
    %v131 = vsel %vm119, %v129, %v130
    %v132 = vrot.slane %v63, 7
    %v133 = vrot.slane %v64, 7
    %v134 = vsel %vm119, %v132, %v133
    %v135 = vrot.slane %v65, 7
    %v136 = vrot.slane %v66, 7
    %v137 = vsel %vm119, %v135, %v136
    %v138 = vrot.slane %v67, 7
    %v139 = vrot.slane %v68, 7
    %v140 = vsel %vm119, %v138, %v139
    %v141 = vrot.slane %v69, 7
    %v142 = vrot.slane %v70, 7
    %v143 = vsel %vm119, %v141, %v142
    %v144 = vrot.slane %v71, 7
    %v145 = vrot.slane %v72, 7
    %v146 = vsel %vm119, %v144, %v145
    %v147 = vrot.slane %v73, 7
    %v148 = vrot.slane %v74, 7
    %v149 = vsel %vm119, %v147, %v148
    %v150 = vrot.slane %v75, 7
    %v151 = vrot.slane %v76, 7
    %v152 = vsel %vm119, %v150, %v151
    %v153 = vrot.slane %v77, 7
    %v154 = vrot.slane %v78, 7
    %v155 = vsel %vm119, %v153, %v154
    %v156 = vrot.slane %v79, 7
    %v157 = vrot.slane %v80, 7
    %v158 = vsel %vm119, %v156, %v157
    %v159 = vrot.slane %v81, 7
    %v160 = vrot.slane %v82, 7
    %v161 = vsel %vm119, %v159, %v160
    %v162 = vrot.slane %v83, 7
    %v163 = vrot.slane %v84, 7
    %v164 = vsel %vm119, %v162, %v163
    %v165 = vrot.slane %v85, 7
    %v166 = vrot.slane %v86, 7
    %v167 = vsel %vm119, %v165, %v166
    %v200 = vsel %vm119, 0.0, %v120
    %v201 = vsel %vm119, 0.0, %v123
    %v202 = vsel %vm119, 0.0, %v126
    %v203 = vsel %vm119, 0.0, %v129
    %v204 = vsel %vm119, 0.0, %v132
    %v205 = vsel %vm119, 0.0, %v135
    %v206 = vsel %vm119, 0.0, %v138
    %v207 = vsel %vm119, 0.0, %v141
    %v208 = vsel %vm119, 0.0, %v144
    %v209 = vsel %vm119, 0.0, %v147
    %v210 = vsel %vm119, 0.0, %v150
    %v211 = vsel %vm119, 0.0, %v153
    %v212 = vsel %vm119, 0.0, %v156
    %v213 = vsel %vm119, 0.0, %v159
    %v214 = vsel %vm119, 0.0, %v162
    %v215 = vsel %vm119, 0.0, %v165
    %vm216 = vcmask 1046528
    %v217 = vrot.slane %v55, 1
    %v218 = vrot.slane %v56, 1
    %v219 = vsel %vm216, %v217, %v218
    %v220 = vrot.slane %v57, 1
    %v221 = vrot.slane %v58, 1
    %v222 = vsel %vm216, %v220, %v221
    %v223 = vrot.slane %v59, 1
    %v224 = vrot.slane %v60, 1
    %v225 = vsel %vm216, %v223, %v224
    %v226 = vrot.slane %v61, 1
    %v227 = vrot.slane %v62, 1
    %v228 = vsel %vm216, %v226, %v227
    %v229 = vrot.slane %v63, 1
    %v230 = vrot.slane %v64, 1
    %v231 = vsel %vm216, %v229, %v230
    %v232 = vrot.slane %v65, 1
    %v233 = vrot.slane %v66, 1
    %v234 = vsel %vm216, %v232, %v233
    %v235 = vrot.slane %v67, 1
    %v236 = vrot.slane %v68, 1
    %v237 = vsel %vm216, %v235, %v236
    %v238 = vrot.slane %v69, 1
    %v239 = vrot.slane %v70, 1
    %v240 = vsel %vm216, %v238, %v239
    %v241 = vrot.slane %v71, 1
    %v242 = vrot.slane %v72, 1
    %v243 = vsel %vm216, %v241, %v242
    %v244 = vrot.slane %v73, 1
    %v245 = vrot.slane %v74, 1
    %v246 = vsel %vm216, %v244, %v245
    %v247 = vrot.slane %v75, 1
    %v248 = vrot.slane %v76, 1
    %v249 = vsel %vm216, %v247, %v248
    %v250 = vrot.slane %v77, 1
    %v251 = vrot.slane %v78, 1
    %v252 = vsel %vm216, %v250, %v251
    %v253 = vrot.slane %v79, 1
    %v254 = vrot.slane %v80, 1
    %v255 = vsel %vm216, %v253, %v254
    %v256 = vrot.slane %v81, 1
    %v257 = vrot.slane %v82, 1
    %v258 = vsel %vm216, %v256, %v257
    %v259 = vrot.slane %v83, 1
    %v260 = vrot.slane %v84, 1
    %v261 = vsel %vm216, %v259, %v260
    %v262 = vrot.slane %v85, 1
    %v263 = vrot.slane %v86, 1
    %v264 = vsel %vm216, %v262, %v263
    %v297 = vsel %vm216, %v218, 0.0
    %v298 = vsel %vm216, %v221, 0.0
    %v299 = vsel %vm216, %v224, 0.0
    %v300 = vsel %vm216, %v227, 0.0
    %v301 = vsel %vm216, %v230, 0.0
    %v302 = vsel %vm216, %v233, 0.0
    %v303 = vsel %vm216, %v236, 0.0
    %v304 = vsel %vm216, %v239, 0.0
    %v305 = vsel %vm216, %v242, 0.0
    %v306 = vsel %vm216, %v245, 0.0
    %v307 = vsel %vm216, %v248, 0.0
    %v308 = vsel %vm216, %v251, 0.0
    %v309 = vsel %vm216, %v254, 0.0
    %v310 = vsel %vm216, %v257, 0.0
    %v311 = vsel %vm216, %v260, 0.0
    %v312 = vsel %vm216, %v263, 0.0
    %v313 = vmul.f32 %v55, 0.5
    %v314 = vmul.f32 %v56, 0.5
    %v315 = vmul.f32 %v57, 0.5
    %v316 = vmul.f32 %v58, 0.5
    %v317 = vmul.f32 %v59, 0.5
    %v318 = vmul.f32 %v60, 0.5
    %v319 = vmul.f32 %v61, 0.5
    %v320 = vmul.f32 %v62, 0.5
    %v321 = vmul.f32 %v63, 0.5
    %v322 = vmul.f32 %v64, 0.5
    %v323 = vmul.f32 %v65, 0.5
    %v324 = vmul.f32 %v66, 0.5
    %v325 = vmul.f32 %v67, 0.5
    %v326 = vmul.f32 %v68, 0.5
    %v327 = vmul.f32 %v69, 0.5
    %v328 = vmul.f32 %v70, 0.5
    %v329 = vmul.f32 %v71, 0.5
    %v330 = vmul.f32 %v72, 0.5
    %v331 = vmul.f32 %v73, 0.5
    %v332 = vmul.f32 %v74, 0.5
    %v333 = vmul.f32 %v75, 0.5
    %v334 = vmul.f32 %v76, 0.5
    %v335 = vmul.f32 %v77, 0.5
    %v336 = vmul.f32 %v78, 0.5
    %v337 = vmul.f32 %v79, 0.5
    %v338 = vmul.f32 %v80, 0.5
    %v339 = vmul.f32 %v81, 0.5
    %v340 = vmul.f32 %v82, 0.5
    %v341 = vmul.f32 %v83, 0.5
    %v342 = vmul.f32 %v84, 0.5
    %v343 = vmul.f32 %v85, 0.5
    %v344 = vmul.f32 %v86, 0.5
    %v345 = vmul.f32 %v200, 0.25
    %v346 = vmul.f32 %v122, 0.25
    %v347 = vmul.f32 %v201, 0.25
    %v348 = vmul.f32 %v125, 0.25
    %v349 = vmul.f32 %v202, 0.25
    %v350 = vmul.f32 %v128, 0.25
    %v351 = vmul.f32 %v203, 0.25
    %v352 = vmul.f32 %v131, 0.25
    %v353 = vmul.f32 %v204, 0.25
    %v354 = vmul.f32 %v134, 0.25
    %v355 = vmul.f32 %v205, 0.25
    %v356 = vmul.f32 %v137, 0.25
    %v357 = vmul.f32 %v206, 0.25
    %v358 = vmul.f32 %v140, 0.25
    %v359 = vmul.f32 %v207, 0.25
    %v360 = vmul.f32 %v143, 0.25
    %v361 = vmul.f32 %v208, 0.25
    %v362 = vmul.f32 %v146, 0.25
    %v363 = vmul.f32 %v209, 0.25
    %v364 = vmul.f32 %v149, 0.25
    %v365 = vmul.f32 %v210, 0.25
    %v366 = vmul.f32 %v152, 0.25
    %v367 = vmul.f32 %v211, 0.25
    %v368 = vmul.f32 %v155, 0.25
    %v369 = vmul.f32 %v212, 0.25
    %v370 = vmul.f32 %v158, 0.25
    %v371 = vmul.f32 %v213, 0.25
    %v372 = vmul.f32 %v161, 0.25
    %v373 = vmul.f32 %v214, 0.25
    %v374 = vmul.f32 %v164, 0.25
    %v375 = vmul.f32 %v215, 0.25
    %v376 = vmul.f32 %v167, 0.25
    %v377 = vmul.f32 %v219, 0.25
    %v378 = vmul.f32 %v297, 0.25
    %v379 = vmul.f32 %v222, 0.25
    %v380 = vmul.f32 %v298, 0.25
    %v381 = vmul.f32 %v225, 0.25
    %v382 = vmul.f32 %v299, 0.25
    %v383 = vmul.f32 %v228, 0.25
    %v384 = vmul.f32 %v300, 0.25
    %v385 = vmul.f32 %v231, 0.25
    %v386 = vmul.f32 %v301, 0.25
    %v387 = vmul.f32 %v234, 0.25
    %v388 = vmul.f32 %v302, 0.25
    %v389 = vmul.f32 %v237, 0.25
    %v390 = vmul.f32 %v303, 0.25
    %v391 = vmul.f32 %v240, 0.25
    %v392 = vmul.f32 %v304, 0.25
    %v393 = vmul.f32 %v243, 0.25
    %v394 = vmul.f32 %v305, 0.25
    %v395 = vmul.f32 %v246, 0.25
    %v396 = vmul.f32 %v306, 0.25
    %v397 = vmul.f32 %v249, 0.25
    %v398 = vmul.f32 %v307, 0.25
    %v399 = vmul.f32 %v252, 0.25
    %v400 = vmul.f32 %v308, 0.25
    %v401 = vmul.f32 %v255, 0.25
    %v402 = vmul.f32 %v309, 0.25
    %v403 = vmul.f32 %v258, 0.25
    %v404 = vmul.f32 %v310, 0.25
    %v405 = vmul.f32 %v261, 0.25
    %v406 = vmul.f32 %v311, 0.25
    %v407 = vmul.f32 %v264, 0.25
    %v408 = vmul.f32 %v312, 0.25
    %v409 = vadd.f32 %v345, %v377
    %v410 = vadd.f32 %v346, %v378
    %v411 = vadd.f32 %v347, %v379
    %v412 = vadd.f32 %v348, %v380
    %v413 = vadd.f32 %v349, %v381
    %v414 = vadd.f32 %v350, %v382
    %v415 = vadd.f32 %v351, %v383
    %v416 = vadd.f32 %v352, %v384
    %v417 = vadd.f32 %v353, %v385
    %v418 = vadd.f32 %v354, %v386
    %v419 = vadd.f32 %v355, %v387
    %v420 = vadd.f32 %v356, %v388
    %v421 = vadd.f32 %v357, %v389
    %v422 = vadd.f32 %v358, %v390
    %v423 = vadd.f32 %v359, %v391
    %v424 = vadd.f32 %v360, %v392
    %v425 = vadd.f32 %v361, %v393
    %v426 = vadd.f32 %v362, %v394
    %v427 = vadd.f32 %v363, %v395
    %v428 = vadd.f32 %v364, %v396
    %v429 = vadd.f32 %v365, %v397
    %v430 = vadd.f32 %v366, %v398
    %v431 = vadd.f32 %v367, %v399
    %v432 = vadd.f32 %v368, %v400
    %v433 = vadd.f32 %v369, %v401
    %v434 = vadd.f32 %v370, %v402
    %v435 = vadd.f32 %v371, %v403
    %v436 = vadd.f32 %v372, %v404
    %v437 = vadd.f32 %v373, %v405
    %v438 = vadd.f32 %v374, %v406
    %v439 = vadd.f32 %v375, %v407
    %v440 = vadd.f32 %v376, %v408
    %v441 = vadd.f32 %v313, %v409
    %v442 = vadd.f32 %v314, %v410
    %v443 = vadd.f32 %v315, %v411
    %v444 = vadd.f32 %v316, %v412
    %v445 = vadd.f32 %v317, %v413
    %v446 = vadd.f32 %v318, %v414
    %v447 = vadd.f32 %v319, %v415
    %v448 = vadd.f32 %v320, %v416
    %v449 = vadd.f32 %v321, %v417
    %v450 = vadd.f32 %v322, %v418
    %v451 = vadd.f32 %v323, %v419
    %v452 = vadd.f32 %v324, %v420
    %v453 = vadd.f32 %v325, %v421
    %v454 = vadd.f32 %v326, %v422
    %v455 = vadd.f32 %v327, %v423
    %v456 = vadd.f32 %v328, %v424
    %v457 = vadd.f32 %v329, %v425
    %v458 = vadd.f32 %v330, %v426
    %v459 = vadd.f32 %v331, %v427
    %v460 = vadd.f32 %v332, %v428
    %v461 = vadd.f32 %v333, %v429
    %v462 = vadd.f32 %v334, %v430
    %v463 = vadd.f32 %v335, %v431
    %v464 = vadd.f32 %v336, %v432
    %v465 = vadd.f32 %v337, %v433
    %v466 = vadd.f32 %v338, %v434
    %v467 = vadd.f32 %v339, %v435
    %v468 = vadd.f32 %v340, %v436
    %v469 = vadd.f32 %v341, %v437
    %v470 = vadd.f32 %v342, %v438
    %v471 = vadd.f32 %v343, %v439
    %v472 = vadd.f32 %v344, %v440
    %473 = vst [vmem:[#allocation2] sm:$0xff] 0.0
    %474 = vst [vmem:[#allocation2 + $0x8] sm:$0xff] 0.0
    %s475 = scalar_lea.vmem [#allocation2], 272
    %476 = vst [vmem:[%s475] sm:$0xff] 0.0
    %477 = vst [vmem:[%s475 + $0x8] sm:$0xff] 0.0
    %s478 = scalar_lea.vmem [#allocation2], 16
    %479 = vst [vmem:[%s478] sm:$0xff] %v441
    %480 = vst [vmem:[%s478 + $0x8] sm:$0xff] %v442
    %481 = vst [vmem:[%s478 + $0x10] sm:$0xff] %v443
    %482 = vst [vmem:[%s478 + $0x18] sm:$0xff] %v444
    %483 = vst [vmem:[%s478 + $0x20] sm:$0xff] %v445
    %484 = vst [vmem:[%s478 + $0x28] sm:$0xff] %v446
    %485 = vst [vmem:[%s478 + $0x30] sm:$0xff] %v447
    %486 = vst [vmem:[%s478 + $0x38] sm:$0xff] %v448
    %487 = vst [vmem:[%s478 + $0x40] sm:$0xff] %v449
    %488 = vst [vmem:[%s478 + $0x48] sm:$0xff] %v450
    %489 = vst [vmem:[%s478 + $0x50] sm:$0xff] %v451
    %490 = vst [vmem:[%s478 + $0x58] sm:$0xff] %v452
    %491 = vst [vmem:[%s478 + $0x60] sm:$0xff] %v453
    %492 = vst [vmem:[%s478 + $0x68] sm:$0xff] %v454
    %493 = vst [vmem:[%s478 + $0x70] sm:$0xff] %v455
    %494 = vst [vmem:[%s478 + $0x78] sm:$0xff] %v456
    %495 = vst [vmem:[%s478 + $0x80] sm:$0xff] %v457
    %496 = vst [vmem:[%s478 + $0x88] sm:$0xff] %v458
    %497 = vst [vmem:[%s478 + $0x90] sm:$0xff] %v459
    %498 = vst [vmem:[%s478 + $0x98] sm:$0xff] %v460
    %499 = vst [vmem:[%s478 + $0xa0] sm:$0xff] %v461
    %500 = vst [vmem:[%s478 + $0xa8] sm:$0xff] %v462
    %501 = vst [vmem:[%s478 + $0xb0] sm:$0xff] %v463
    %502 = vst [vmem:[%s478 + $0xb8] sm:$0xff] %v464
    %503 = vst [vmem:[%s478 + $0xc0] sm:$0xff] %v465
    %504 = vst [vmem:[%s478 + $0xc8] sm:$0xff] %v466
    %505 = vst [vmem:[%s478 + $0xd0] sm:$0xff] %v467
    %506 = vst [vmem:[%s478 + $0xd8] sm:$0xff] %v468
    %507 = vst [vmem:[%s478 + $0xe0] sm:$0xff] %v469
    %508 = vst [vmem:[%s478 + $0xe8] sm:$0xff] %v470
    %509 = vst [vmem:[%s478 + $0xf0] sm:$0xff] %v471
    %510 = vst [vmem:[%s478 + $0xf8] sm:$0xff] %v472
    %v511 = vmul.f32 %v441, 0.5
    %v512 = vmul.f32 %v442, 0.5
    %v513 = vmul.f32 %v443, 0.5
    %v514 = vmul.f32 %v444, 0.5
    %v515 = vmul.f32 %v445, 0.5
    %v516 = vmul.f32 %v446, 0.5
    %v517 = vmul.f32 %v447, 0.5
    %v518 = vmul.f32 %v448, 0.5
    %v519 = vmul.f32 %v449, 0.5
    %v520 = vmul.f32 %v450, 0.5
    %v521 = vmul.f32 %v451, 0.5
    %v522 = vmul.f32 %v452, 0.5
    %v523 = vmul.f32 %v453, 0.5
    %v524 = vmul.f32 %v454, 0.5
    %v525 = vmul.f32 %v455, 0.5
    %v526 = vmul.f32 %v456, 0.5
    %v527 = vmul.f32 %v457, 0.5
    %v528 = vmul.f32 %v458, 0.5
    %v529 = vmul.f32 %v459, 0.5
    %v530 = vmul.f32 %v460, 0.5
    %v531 = vmul.f32 %v461, 0.5
    %v532 = vmul.f32 %v462, 0.5
    %v533 = vmul.f32 %v463, 0.5
    %v534 = vmul.f32 %v464, 0.5
    %v535 = vmul.f32 %v465, 0.5
    %v536 = vmul.f32 %v466, 0.5
    %v537 = vmul.f32 %v467, 0.5
    %v538 = vmul.f32 %v468, 0.5
    %v539 = vmul.f32 %v469, 0.5
    %v540 = vmul.f32 %v470, 0.5
    %v541 = vmul.f32 %v471, 0.5
    %v542 = vmul.f32 %v472, 0.5
    %v543 = vld [vmem:[#allocation2] sm:$0xff]
    %v544 = vld [vmem:[#allocation2 + $0x8] sm:$0xff]
    %v545 = vld [vmem:[#allocation2 + $0x10] sm:$0xff]
    %v546 = vld [vmem:[#allocation2 + $0x18] sm:$0xff]
    %v547 = vld [vmem:[#allocation2 + $0x20] sm:$0xff]
    %v548 = vld [vmem:[#allocation2 + $0x28] sm:$0xff]
    %v549 = vld [vmem:[#allocation2 + $0x30] sm:$0xff]
    %v550 = vld [vmem:[#allocation2 + $0x38] sm:$0xff]
    %v551 = vld [vmem:[#allocation2 + $0x40] sm:$0xff]
    %v552 = vld [vmem:[#allocation2 + $0x48] sm:$0xff]
    %v553 = vld [vmem:[#allocation2 + $0x50] sm:$0xff]
    %v554 = vld [vmem:[#allocation2 + $0x58] sm:$0xff]
    %v555 = vld [vmem:[#allocation2 + $0x60] sm:$0xff]
    %v556 = vld [vmem:[#allocation2 + $0x68] sm:$0xff]
    %v557 = vld [vmem:[#allocation2 + $0x70] sm:$0xff]
    %v558 = vld [vmem:[#allocation2 + $0x78] sm:$0xff]
    %v559 = vld [vmem:[#allocation2 + $0x80] sm:$0xff]
    %v560 = vld [vmem:[#allocation2 + $0x88] sm:$0xff]
    %v561 = vld [vmem:[#allocation2 + $0x90] sm:$0xff]
    %v562 = vld [vmem:[#allocation2 + $0x98] sm:$0xff]
    %v563 = vld [vmem:[#allocation2 + $0xa0] sm:$0xff]
    %v564 = vld [vmem:[#allocation2 + $0xa8] sm:$0xff]
    %v565 = vld [vmem:[#allocation2 + $0xb0] sm:$0xff]
    %v566 = vld [vmem:[#allocation2 + $0xb8] sm:$0xff]
    %v567 = vld [vmem:[#allocation2 + $0xc0] sm:$0xff]
    %v568 = vld [vmem:[#allocation2 + $0xc8] sm:$0xff]
    %v569 = vld [vmem:[#allocation2 + $0xd0] sm:$0xff]
    %v570 = vld [vmem:[#allocation2 + $0xd8] sm:$0xff]
    %v571 = vld [vmem:[#allocation2 + $0xe0] sm:$0xff]
    %v572 = vld [vmem:[#allocation2 + $0xe8] sm:$0xff]
    %v573 = vld [vmem:[#allocation2 + $0xf0] sm:$0xff]
    %v574 = vld [vmem:[#allocation2 + $0xf8] sm:$0xff]
    %v575 = vmul.f32 %v543, 0.25
    %v576 = vmul.f32 %v544, 0.25
    %v577 = vmul.f32 %v545, 0.25
    %v578 = vmul.f32 %v546, 0.25
    %v579 = vmul.f32 %v547, 0.25
    %v580 = vmul.f32 %v548, 0.25
    %v581 = vmul.f32 %v549, 0.25
    %v582 = vmul.f32 %v550, 0.25
    %v583 = vmul.f32 %v551, 0.25
    %v584 = vmul.f32 %v552, 0.25
    %v585 = vmul.f32 %v553, 0.25
    %v586 = vmul.f32 %v554, 0.25
    %v587 = vmul.f32 %v555, 0.25
    %v588 = vmul.f32 %v556, 0.25
    %v589 = vmul.f32 %v557, 0.25
    %v590 = vmul.f32 %v558, 0.25
    %v591 = vmul.f32 %v559, 0.25
    %v592 = vmul.f32 %v560, 0.25
    %v593 = vmul.f32 %v561, 0.25
    %v594 = vmul.f32 %v562, 0.25
    %v595 = vmul.f32 %v563, 0.25
    %v596 = vmul.f32 %v564, 0.25
    %v597 = vmul.f32 %v565, 0.25
    %v598 = vmul.f32 %v566, 0.25
    %v599 = vmul.f32 %v567, 0.25
    %v600 = vmul.f32 %v568, 0.25
    %v601 = vmul.f32 %v569, 0.25
    %v602 = vmul.f32 %v570, 0.25
    %v603 = vmul.f32 %v571, 0.25
    %v604 = vmul.f32 %v572, 0.25
    %v605 = vmul.f32 %v573, 0.25
    %v606 = vmul.f32 %v574, 0.25
    %s607 = scalar_lea.vmem [#allocation2], 32
    %v608 = vld [vmem:[%s607] sm:$0xff]
    %v609 = vld [vmem:[%s607 + $0x8] sm:$0xff]
    %v610 = vld [vmem:[%s607 + $0x10] sm:$0xff]
    %v611 = vld [vmem:[%s607 + $0x18] sm:$0xff]
    %v612 = vld [vmem:[%s607 + $0x20] sm:$0xff]
    %v613 = vld [vmem:[%s607 + $0x28] sm:$0xff]
    %v614 = vld [vmem:[%s607 + $0x30] sm:$0xff]
    %v615 = vld [vmem:[%s607 + $0x38] sm:$0xff]
    %v616 = vld [vmem:[%s607 + $0x40] sm:$0xff]
    %v617 = vld [vmem:[%s607 + $0x48] sm:$0xff]
    %v618 = vld [vmem:[%s607 + $0x50] sm:$0xff]
    %v619 = vld [vmem:[%s607 + $0x58] sm:$0xff]
    %v620 = vld [vmem:[%s607 + $0x60] sm:$0xff]
    %v621 = vld [vmem:[%s607 + $0x68] sm:$0xff]
    %v622 = vld [vmem:[%s607 + $0x70] sm:$0xff]
    %v623 = vld [vmem:[%s607 + $0x78] sm:$0xff]
    %v624 = vld [vmem:[%s607 + $0x80] sm:$0xff]
    %v625 = vld [vmem:[%s607 + $0x88] sm:$0xff]
    %v626 = vld [vmem:[%s607 + $0x90] sm:$0xff]
    %v627 = vld [vmem:[%s607 + $0x98] sm:$0xff]
    %v628 = vld [vmem:[%s607 + $0xa0] sm:$0xff]
    %v629 = vld [vmem:[%s607 + $0xa8] sm:$0xff]
    %v630 = vld [vmem:[%s607 + $0xb0] sm:$0xff]
    %v631 = vld [vmem:[%s607 + $0xb8] sm:$0xff]
    %v632 = vld [vmem:[%s607 + $0xc0] sm:$0xff]
    %v633 = vld [vmem:[%s607 + $0xc8] sm:$0xff]
    %v634 = vld [vmem:[%s607 + $0xd0] sm:$0xff]
    %v635 = vld [vmem:[%s607 + $0xd8] sm:$0xff]
    %v636 = vld [vmem:[%s607 + $0xe0] sm:$0xff]
    %v637 = vld [vmem:[%s607 + $0xe8] sm:$0xff]
    %v638 = vld [vmem:[%s607 + $0xf0] sm:$0xff]
    %v639 = vld [vmem:[%s607 + $0xf8] sm:$0xff]
    %v640 = vmul.f32 %v608, 0.25
    %v641 = vmul.f32 %v609, 0.25
    %v642 = vmul.f32 %v610, 0.25
    %v643 = vmul.f32 %v611, 0.25
    %v644 = vmul.f32 %v612, 0.25
    %v645 = vmul.f32 %v613, 0.25
    %v646 = vmul.f32 %v614, 0.25
    %v647 = vmul.f32 %v615, 0.25
    %v648 = vmul.f32 %v616, 0.25
    %v649 = vmul.f32 %v617, 0.25
    %v650 = vmul.f32 %v618, 0.25
    %v651 = vmul.f32 %v619, 0.25
    %v652 = vmul.f32 %v620, 0.25
    %v653 = vmul.f32 %v621, 0.25
    %v654 = vmul.f32 %v622, 0.25
    %v655 = vmul.f32 %v623, 0.25
    %v656 = vmul.f32 %v624, 0.25
    %v657 = vmul.f32 %v625, 0.25
    %v658 = vmul.f32 %v626, 0.25
    %v659 = vmul.f32 %v627, 0.25
    %v660 = vmul.f32 %v628, 0.25
    %v661 = vmul.f32 %v629, 0.25
    %v662 = vmul.f32 %v630, 0.25
    %v663 = vmul.f32 %v631, 0.25
    %v664 = vmul.f32 %v632, 0.25
    %v665 = vmul.f32 %v633, 0.25
    %v666 = vmul.f32 %v634, 0.25
    %v667 = vmul.f32 %v635, 0.25
    %v668 = vmul.f32 %v636, 0.25
    %v669 = vmul.f32 %v637, 0.25
    %v670 = vmul.f32 %v638, 0.25
    %v671 = vmul.f32 %v639, 0.25
    %v672 = vadd.f32 %v575, %v640
    %v673 = vadd.f32 %v576, %v641
    %v674 = vadd.f32 %v577, %v642
    %v675 = vadd.f32 %v578, %v643
    %v676 = vadd.f32 %v579, %v644
    %v677 = vadd.f32 %v580, %v645
    %v678 = vadd.f32 %v581, %v646
    %v679 = vadd.f32 %v582, %v647
    %v680 = vadd.f32 %v583, %v648
    %v681 = vadd.f32 %v584, %v649
    %v682 = vadd.f32 %v585, %v650
    %v683 = vadd.f32 %v586, %v651
    %v684 = vadd.f32 %v587, %v652
    %v685 = vadd.f32 %v588, %v653
    %v686 = vadd.f32 %v589, %v654
    %v687 = vadd.f32 %v590, %v655
    %v688 = vadd.f32 %v591, %v656
    %v689 = vadd.f32 %v592, %v657
    %v690 = vadd.f32 %v593, %v658
    %v691 = vadd.f32 %v594, %v659
    %v692 = vadd.f32 %v595, %v660
    %v693 = vadd.f32 %v596, %v661
    %v694 = vadd.f32 %v597, %v662
    %v695 = vadd.f32 %v598, %v663
    %v696 = vadd.f32 %v599, %v664
    %v697 = vadd.f32 %v600, %v665
    %v698 = vadd.f32 %v601, %v666
    %v699 = vadd.f32 %v602, %v667
    %v700 = vadd.f32 %v603, %v668
    %v701 = vadd.f32 %v604, %v669
    %v702 = vadd.f32 %v605, %v670
    %v703 = vadd.f32 %v606, %v671
    %v704 = vadd.f32 %v511, %v672
    %v705 = vadd.f32 %v512, %v673
    %v706 = vadd.f32 %v513, %v674
    %v707 = vadd.f32 %v514, %v675
    %v708 = vadd.f32 %v515, %v676
    %v709 = vadd.f32 %v516, %v677
    %v710 = vadd.f32 %v517, %v678
    %v711 = vadd.f32 %v518, %v679
    %v712 = vadd.f32 %v519, %v680
    %v713 = vadd.f32 %v520, %v681
    %v714 = vadd.f32 %v521, %v682
    %v715 = vadd.f32 %v522, %v683
    %v716 = vadd.f32 %v523, %v684
    %v717 = vadd.f32 %v524, %v685
    %v718 = vadd.f32 %v525, %v686
    %v719 = vadd.f32 %v526, %v687
    %v720 = vadd.f32 %v527, %v688
    %v721 = vadd.f32 %v528, %v689
    %v722 = vadd.f32 %v529, %v690
    %v723 = vadd.f32 %v530, %v691
    %v724 = vadd.f32 %v531, %v692
    %v725 = vadd.f32 %v532, %v693
    %v726 = vadd.f32 %v533, %v694
    %v727 = vadd.f32 %v534, %v695
    %v728 = vadd.f32 %v535, %v696
    %v729 = vadd.f32 %v536, %v697
    %v730 = vadd.f32 %v537, %v698
    %v731 = vadd.f32 %v538, %v699
    %v732 = vadd.f32 %v539, %v700
    %v733 = vadd.f32 %v540, %v701
    %v734 = vadd.f32 %v541, %v702
    %v735 = vadd.f32 %v542, %v703
    %v736 = vadd.f32 %v704, 1e-12
    %v737 = vadd.f32 %v705, 1e-12
    %v738 = vadd.f32 %v706, 1e-12
    %v739 = vadd.f32 %v707, 1e-12
    %v740 = vadd.f32 %v708, 1e-12
    %v741 = vadd.f32 %v709, 1e-12
    %v742 = vadd.f32 %v710, 1e-12
    %v743 = vadd.f32 %v711, 1e-12
    %v744 = vadd.f32 %v712, 1e-12
    %v745 = vadd.f32 %v713, 1e-12
    %v746 = vadd.f32 %v714, 1e-12
    %v747 = vadd.f32 %v715, 1e-12
    %v748 = vadd.f32 %v716, 1e-12
    %v749 = vadd.f32 %v717, 1e-12
    %v750 = vadd.f32 %v718, 1e-12
    %v751 = vadd.f32 %v719, 1e-12
    %v752 = vadd.f32 %v720, 1e-12
    %v753 = vadd.f32 %v721, 1e-12
    %v754 = vadd.f32 %v722, 1e-12
    %v755 = vadd.f32 %v723, 1e-12
    %v756 = vadd.f32 %v724, 1e-12
    %v757 = vadd.f32 %v725, 1e-12
    %v758 = vadd.f32 %v726, 1e-12
    %v759 = vadd.f32 %v727, 1e-12
    %v760 = vadd.f32 %v728, 1e-12
    %v761 = vadd.f32 %v729, 1e-12
    %v762 = vadd.f32 %v730, 1e-12
    %v763 = vadd.f32 %v731, 1e-12
    %v764 = vadd.f32 %v732, 1e-12
    %v765 = vadd.f32 %v733, 1e-12
    %v766 = vadd.f32 %v734, 1e-12
    %v767 = vadd.f32 %v735, 1e-12
    %v768 = vrsqrt.pop %v736
    %v769 = vmul.f32 %v736, %v768
    %vm770 = vcmp.eq.f32.partialorder %v736, inf
    %v771 = vsel %vm770, %v736, %v769
    %vm772 = vcmp.eq.f32.partialorder %v736, 0.0
    %v773 = vand.u32 %v736, 2147483648
    %v774 = vsel %vm772, %v773, %v771
    %v775 = vrsqrt.pop %v737
    %v776 = vmul.f32 %v737, %v775
    %vm777 = vcmp.eq.f32.partialorder %v737, inf
    %v778 = vsel %vm777, %v737, %v776
    %vm779 = vcmp.eq.f32.partialorder %v737, 0.0
    %v780 = vand.u32 %v737, 2147483648
    %v781 = vsel %vm779, %v780, %v778
    %v782 = vrsqrt.pop %v738
    %v783 = vmul.f32 %v738, %v782
    %vm784 = vcmp.eq.f32.partialorder %v738, inf
    %v785 = vsel %vm784, %v738, %v783
    %vm786 = vcmp.eq.f32.partialorder %v738, 0.0
    %v787 = vand.u32 %v738, 2147483648
    %v788 = vsel %vm786, %v787, %v785
    %v789 = vrsqrt.pop %v739
    %v790 = vmul.f32 %v739, %v789
    %vm791 = vcmp.eq.f32.partialorder %v739, inf
    %v792 = vsel %vm791, %v739, %v790
    %vm793 = vcmp.eq.f32.partialorder %v739, 0.0
    %v794 = vand.u32 %v739, 2147483648
    %v795 = vsel %vm793, %v794, %v792
    %v796 = vrsqrt.pop %v740
    %v797 = vmul.f32 %v740, %v796
    %vm798 = vcmp.eq.f32.partialorder %v740, inf
    %v799 = vsel %vm798, %v740, %v797
    %vm800 = vcmp.eq.f32.partialorder %v740, 0.0
    %v801 = vand.u32 %v740, 2147483648
    %v802 = vsel %vm800, %v801, %v799
    %v803 = vrsqrt.pop %v741
    %v804 = vmul.f32 %v741, %v803
    %vm805 = vcmp.eq.f32.partialorder %v741, inf
    %v806 = vsel %vm805, %v741, %v804
    %vm807 = vcmp.eq.f32.partialorder %v741, 0.0
    %v808 = vand.u32 %v741, 2147483648
    %v809 = vsel %vm807, %v808, %v806
    %v810 = vrsqrt.pop %v742
    %v811 = vmul.f32 %v742, %v810
    %vm812 = vcmp.eq.f32.partialorder %v742, inf
    %v813 = vsel %vm812, %v742, %v811
    %vm814 = vcmp.eq.f32.partialorder %v742, 0.0
    %v815 = vand.u32 %v742, 2147483648
    %v816 = vsel %vm814, %v815, %v813
    %v817 = vrsqrt.pop %v743
    %v818 = vmul.f32 %v743, %v817
    %vm819 = vcmp.eq.f32.partialorder %v743, inf
    %v820 = vsel %vm819, %v743, %v818
    %vm821 = vcmp.eq.f32.partialorder %v743, 0.0
    %v822 = vand.u32 %v743, 2147483648
    %v823 = vsel %vm821, %v822, %v820
    %v824 = vrsqrt.pop %v744
    %v825 = vmul.f32 %v744, %v824
    %vm826 = vcmp.eq.f32.partialorder %v744, inf
    %v827 = vsel %vm826, %v744, %v825
    %vm828 = vcmp.eq.f32.partialorder %v744, 0.0
    %v829 = vand.u32 %v744, 2147483648
    %v830 = vsel %vm828, %v829, %v827
    %v831 = vrsqrt.pop %v745
    %v832 = vmul.f32 %v745, %v831
    %vm833 = vcmp.eq.f32.partialorder %v745, inf
    %v834 = vsel %vm833, %v745, %v832
    %vm835 = vcmp.eq.f32.partialorder %v745, 0.0
    %v836 = vand.u32 %v745, 2147483648
    %v837 = vsel %vm835, %v836, %v834
    %v838 = vrsqrt.pop %v746
    %v839 = vmul.f32 %v746, %v838
    %vm840 = vcmp.eq.f32.partialorder %v746, inf
    %v841 = vsel %vm840, %v746, %v839
    %vm842 = vcmp.eq.f32.partialorder %v746, 0.0
    %v843 = vand.u32 %v746, 2147483648
    %v844 = vsel %vm842, %v843, %v841
    %v845 = vrsqrt.pop %v747
    %v846 = vmul.f32 %v747, %v845
    %vm847 = vcmp.eq.f32.partialorder %v747, inf
    %v848 = vsel %vm847, %v747, %v846
    %vm849 = vcmp.eq.f32.partialorder %v747, 0.0
    %v850 = vand.u32 %v747, 2147483648
    %v851 = vsel %vm849, %v850, %v848
    %v852 = vrsqrt.pop %v748
    %v853 = vmul.f32 %v748, %v852
    %vm854 = vcmp.eq.f32.partialorder %v748, inf
    %v855 = vsel %vm854, %v748, %v853
    %vm856 = vcmp.eq.f32.partialorder %v748, 0.0
    %v857 = vand.u32 %v748, 2147483648
    %v858 = vsel %vm856, %v857, %v855
    %v859 = vrsqrt.pop %v749
    %v860 = vmul.f32 %v749, %v859
    %vm861 = vcmp.eq.f32.partialorder %v749, inf
    %v862 = vsel %vm861, %v749, %v860
    %vm863 = vcmp.eq.f32.partialorder %v749, 0.0
    %v864 = vand.u32 %v749, 2147483648
    %v865 = vsel %vm863, %v864, %v862
    %v866 = vrsqrt.pop %v750
    %v867 = vmul.f32 %v750, %v866
    %vm868 = vcmp.eq.f32.partialorder %v750, inf
    %v869 = vsel %vm868, %v750, %v867
    %vm870 = vcmp.eq.f32.partialorder %v750, 0.0
    %v871 = vand.u32 %v750, 2147483648
    %v872 = vsel %vm870, %v871, %v869
    %v873 = vrsqrt.pop %v751
    %v874 = vmul.f32 %v751, %v873
    %vm875 = vcmp.eq.f32.partialorder %v751, inf
    %v876 = vsel %vm875, %v751, %v874
    %vm877 = vcmp.eq.f32.partialorder %v751, 0.0
    %v878 = vand.u32 %v751, 2147483648
    %v879 = vsel %vm877, %v878, %v876
    %v880 = vrsqrt.pop %v752
    %v881 = vmul.f32 %v752, %v880
    %vm882 = vcmp.eq.f32.partialorder %v752, inf
    %v883 = vsel %vm882, %v752, %v881
    %vm884 = vcmp.eq.f32.partialorder %v752, 0.0
    %v885 = vand.u32 %v752, 2147483648
    %v886 = vsel %vm884, %v885, %v883
    %v887 = vrsqrt.pop %v753
    %v888 = vmul.f32 %v753, %v887
    %vm889 = vcmp.eq.f32.partialorder %v753, inf
    %v890 = vsel %vm889, %v753, %v888
    %vm891 = vcmp.eq.f32.partialorder %v753, 0.0
    %v892 = vand.u32 %v753, 2147483648
    %v893 = vsel %vm891, %v892, %v890
    %v894 = vrsqrt.pop %v754
    %v895 = vmul.f32 %v754, %v894
    %vm896 = vcmp.eq.f32.partialorder %v754, inf
    %v897 = vsel %vm896, %v754, %v895
    %vm898 = vcmp.eq.f32.partialorder %v754, 0.0
    %v899 = vand.u32 %v754, 2147483648
    %v900 = vsel %vm898, %v899, %v897
    %v901 = vrsqrt.pop %v755
    %v902 = vmul.f32 %v755, %v901
    %vm903 = vcmp.eq.f32.partialorder %v755, inf
    %v904 = vsel %vm903, %v755, %v902
    %vm905 = vcmp.eq.f32.partialorder %v755, 0.0
    %v906 = vand.u32 %v755, 2147483648
    %v907 = vsel %vm905, %v906, %v904
    %v908 = vrsqrt.pop %v756
    %v909 = vmul.f32 %v756, %v908
    %vm910 = vcmp.eq.f32.partialorder %v756, inf
    %v911 = vsel %vm910, %v756, %v909
    %vm912 = vcmp.eq.f32.partialorder %v756, 0.0
    %v913 = vand.u32 %v756, 2147483648
    %v914 = vsel %vm912, %v913, %v911
    %v915 = vrsqrt.pop %v757
    %v916 = vmul.f32 %v757, %v915
    %vm917 = vcmp.eq.f32.partialorder %v757, inf
    %v918 = vsel %vm917, %v757, %v916
    %vm919 = vcmp.eq.f32.partialorder %v757, 0.0
    %v920 = vand.u32 %v757, 2147483648
    %v921 = vsel %vm919, %v920, %v918
    %v922 = vrsqrt.pop %v758
    %v923 = vmul.f32 %v758, %v922
    %vm924 = vcmp.eq.f32.partialorder %v758, inf
    %v925 = vsel %vm924, %v758, %v923
    %vm926 = vcmp.eq.f32.partialorder %v758, 0.0
    %v927 = vand.u32 %v758, 2147483648
    %v928 = vsel %vm926, %v927, %v925
    %v929 = vrsqrt.pop %v759
    %v930 = vmul.f32 %v759, %v929
    %vm931 = vcmp.eq.f32.partialorder %v759, inf
    %v932 = vsel %vm931, %v759, %v930
    %vm933 = vcmp.eq.f32.partialorder %v759, 0.0
    %v934 = vand.u32 %v759, 2147483648
    %v935 = vsel %vm933, %v934, %v932
    %v936 = vrsqrt.pop %v760
    %v937 = vmul.f32 %v760, %v936
    %vm938 = vcmp.eq.f32.partialorder %v760, inf
    %v939 = vsel %vm938, %v760, %v937
    %vm940 = vcmp.eq.f32.partialorder %v760, 0.0
    %v941 = vand.u32 %v760, 2147483648
    %v942 = vsel %vm940, %v941, %v939
    %v943 = vrsqrt.pop %v761
    %v944 = vmul.f32 %v761, %v943
    %vm945 = vcmp.eq.f32.partialorder %v761, inf
    %v946 = vsel %vm945, %v761, %v944
    %vm947 = vcmp.eq.f32.partialorder %v761, 0.0
    %v948 = vand.u32 %v761, 2147483648
    %v949 = vsel %vm947, %v948, %v946
    %v950 = vrsqrt.pop %v762
    %v951 = vmul.f32 %v762, %v950
    %vm952 = vcmp.eq.f32.partialorder %v762, inf
    %v953 = vsel %vm952, %v762, %v951
    %vm954 = vcmp.eq.f32.partialorder %v762, 0.0
    %v955 = vand.u32 %v762, 2147483648
    %v956 = vsel %vm954, %v955, %v953
    %v957 = vrsqrt.pop %v763
    %v958 = vmul.f32 %v763, %v957
    %vm959 = vcmp.eq.f32.partialorder %v763, inf
    %v960 = vsel %vm959, %v763, %v958
    %vm961 = vcmp.eq.f32.partialorder %v763, 0.0
    %v962 = vand.u32 %v763, 2147483648
    %v963 = vsel %vm961, %v962, %v960
    %v964 = vrsqrt.pop %v764
    %v965 = vmul.f32 %v764, %v964
    %vm966 = vcmp.eq.f32.partialorder %v764, inf
    %v967 = vsel %vm966, %v764, %v965
    %vm968 = vcmp.eq.f32.partialorder %v764, 0.0
    %v969 = vand.u32 %v764, 2147483648
    %v970 = vsel %vm968, %v969, %v967
    %v971 = vrsqrt.pop %v765
    %v972 = vmul.f32 %v765, %v971
    %vm973 = vcmp.eq.f32.partialorder %v765, inf
    %v974 = vsel %vm973, %v765, %v972
    %vm975 = vcmp.eq.f32.partialorder %v765, 0.0
    %v976 = vand.u32 %v765, 2147483648
    %v977 = vsel %vm975, %v976, %v974
    %v978 = vrsqrt.pop %v766
    %v979 = vmul.f32 %v766, %v978
    %vm980 = vcmp.eq.f32.partialorder %v766, inf
    %v981 = vsel %vm980, %v766, %v979
    %vm982 = vcmp.eq.f32.partialorder %v766, 0.0
    %v983 = vand.u32 %v766, 2147483648
    %v984 = vsel %vm982, %v983, %v981
    %v985 = vrsqrt.pop %v767
    %v986 = vmul.f32 %v767, %v985
    %vm987 = vcmp.eq.f32.partialorder %v767, inf
    %v988 = vsel %vm987, %v767, %v986
    %vm989 = vcmp.eq.f32.partialorder %v767, 0.0
    %v990 = vand.u32 %v767, 2147483648
    %v991 = vsel %vm989, %v990, %v988
    %992 = vst [vmem:[#allocation6] sm:$0xff] %v774
    %993 = vst [vmem:[#allocation6 + $0x8] sm:$0xff] %v781
    %994 = vst [vmem:[#allocation6 + $0x10] sm:$0xff] %v788
    %995 = vst [vmem:[#allocation6 + $0x18] sm:$0xff] %v795
    %996 = vst [vmem:[#allocation6 + $0x20] sm:$0xff] %v802
    %997 = vst [vmem:[#allocation6 + $0x28] sm:$0xff] %v809
    %998 = vst [vmem:[#allocation6 + $0x30] sm:$0xff] %v816
    %999 = vst [vmem:[#allocation6 + $0x38] sm:$0xff] %v823
    %1000 = vst [vmem:[#allocation6 + $0x40] sm:$0xff] %v830
    %1001 = vst [vmem:[#allocation6 + $0x48] sm:$0xff] %v837
    %1002 = vst [vmem:[#allocation6 + $0x50] sm:$0xff] %v844
    %1003 = vst [vmem:[#allocation6 + $0x58] sm:$0xff] %v851
    %1004 = vst [vmem:[#allocation6 + $0x60] sm:$0xff] %v858
    %1005 = vst [vmem:[#allocation6 + $0x68] sm:$0xff] %v865
    %1006 = vst [vmem:[#allocation6 + $0x70] sm:$0xff] %v872
    %1007 = vst [vmem:[#allocation6 + $0x78] sm:$0xff] %v879
    %1008 = vst [vmem:[#allocation6 + $0x80] sm:$0xff] %v886
    %1009 = vst [vmem:[#allocation6 + $0x88] sm:$0xff] %v893
    %1010 = vst [vmem:[#allocation6 + $0x90] sm:$0xff] %v900
    %1011 = vst [vmem:[#allocation6 + $0x98] sm:$0xff] %v907
    %1012 = vst [vmem:[#allocation6 + $0xa0] sm:$0xff] %v914
    %1013 = vst [vmem:[#allocation6 + $0xa8] sm:$0xff] %v921
    %1014 = vst [vmem:[#allocation6 + $0xb0] sm:$0xff] %v928
    %1015 = vst [vmem:[#allocation6 + $0xb8] sm:$0xff] %v935
    %1016 = vst [vmem:[#allocation6 + $0xc0] sm:$0xff] %v942
    %1017 = vst [vmem:[#allocation6 + $0xc8] sm:$0xff] %v949
    %1018 = vst [vmem:[#allocation6 + $0xd0] sm:$0xff] %v956
    %1019 = vst [vmem:[#allocation6 + $0xd8] sm:$0xff] %v963
    %1020 = vst [vmem:[#allocation6 + $0xe0] sm:$0xff] %v970
    %1021 = vst [vmem:[#allocation6 + $0xe8] sm:$0xff] %v977
    %1022 = vst [vmem:[#allocation6 + $0xf0] sm:$0xff] %v984
    %1023 = vst [vmem:[#allocation6 + $0xf8] sm:$0xff] %v991
    // Predicated region
    $region10: #{tpu_custom_call.1} parent=1 // pred_check
      _
    $region11: #{tpu_custom_call.1} parent=1 // pred_check_branch
      %1025 = sbr.rel (0) target = $region13
    $region12: #{tpu_custom_call.1} parent=1 // pred_region
      %s1027 = ssub.s32 4096, 4096
      %1028 = vsyncadd [#allocation5], %s1027
      %s1029 = sshll.u32 [#allocation6], 4
      %s1030 = int_to_ptr.vmem [resolvable:$true] %s1029
      %1035 = dma.vmem_to_hbm [thread:$0]  %s1030, 4096, %s1, [#allocation5], 128, 128, 8
    $region13: #{tpu_custom_call.1} parent=1 // pred_fallthru
      _
    // Predicated region
    $region14: #{tpu_custom_call.1} parent=1 // pred_check
      _
    $region15: #{tpu_custom_call.1} parent=1 // pred_check_branch
      %1037 = sbr.rel (0) target = $region17
    $region16: #{tpu_custom_call.1} parent=1 // pred_region
      %1038 = dma.done [#allocation5], 4096
    $region17: #{tpu_custom_call.1} parent=1 // pred_fallthru
      _
    %1039 = vsyncpa [#allocation4], 1
    %1040 = vsyncpa [#allocation5], 1

</llo_original>
